<compile_context>
chip_gen: v5e
topology: v5e:2x2
jax: 0.10.0
libtpu: 0.0.40
codegen_flags: <defaults>
</compile_context>

<pallas_src>
import jax
import jax.numpy as jnp
import numpy as np
from jax import lax
from jax.experimental import pallas as pl
from jax.experimental.pallas import tpu as pltpu


def ncf_kernel(xT_ref, m_ref, b1_ref, *rest):
    """rest = [W2T, b2, W3T, b3, ..., w_out_row, b_out(SMEM), out_ref]."""
    layer_refs = rest[:-3]
    wout_ref, bout_ref, out_ref = rest[-3], rest[-2], rest[-1]

    F, TB = xT_ref.shape            # fields, batch tile (batch on lanes)
    H1, FV = m_ref.shape            # first hidden dim, F * vocab
    V = FV // F
    compute_dtype = m_ref.dtype     # bf16 (or f32) matmul inputs

    xT = xT_ref[...]                                              # (F, TB) int32
    iota_v = lax.broadcasted_iota(jnp.int32, (V, TB), 0)          # hoisted once

    # ---- stacked exact one-hot over all fields: (F*V, TB) --------------------
    parts = [(iota_v == xT[f:f + 1, :]) for f in range(F)]        # static loop, F small
    onehot = jnp.concatenate(parts, axis=0).astype(compute_dtype)  # exact in bf16

    # ---- fused embedding gather + MLP layer 1: one big MXU matmul ------------
    z = jnp.dot(m_ref[...], onehot,
                preferred_element_type=jnp.float32) + b1_ref[...]  # (H1, TB) f32
    h = jnp.maximum(z, 0.0)

    # ---- remaining hidden layers (transposed): h = relu(W.T @ h + b) ---------
    for li in range(0, len(layer_refs), 2):
        wT_ref, b_ref = layer_refs[li], layer_refs[li + 1]
        z = jnp.dot(wT_ref[...], h.astype(compute_dtype),
                    preferred_element_type=jnp.float32) + b_ref[...]
        h = jnp.maximum(z, 0.0)                                    # (H, TB) f32
        # TODO(synk): dropout is identity at inference; omitted on purpose.

    # ---- final Linear(H_last, 1) as a tiny matmul (rides the MXU slot) -------
    logits = jnp.dot(wout_ref[...], h.astype(compute_dtype),
                     preferred_element_type=jnp.float32) + bout_ref[0]  # (1, TB)
    out_ref[...] = jax.nn.sigmoid(logits)                          # lane-dense store


def ncf_forward(x_user, x_item, table, mlp_weights, mlp_biases, w_out, b_out,
                *, tile_b=512, use_bf16=True):
    """Returns (sigmoid(mlp(embed(cat(x_user, x_item)))), None) like NCF.forward."""
    x = jnp.concatenate([x_user, x_item], axis=1).astype(jnp.int32)   # (B, F)
    B, F = x.shape
    V, D = table.shape
    assert len(mlp_weights) >= 1, "NCF MLP needs at least one hidden layer"

    # ---- batch-tile selection: lane-aligned, >= 2 tiles when possible (v7x) --
    tile_b = min(tile_b, B)
    if B % tile_b != 0:
        tile_b = B                                 # single-tile fallback (still correct)
    if B // tile_b == 1 and B % 2 == 0 and (B // 2) % 128 == 0:
        tile_b = B // 2                            # keep both v7x TensorCores busy
    assert B % tile_b == 0
    assert tile_b % 128 == 0 or tile_b == B, "batch tile must be lane-aligned"
    num_tiles = B // tile_b

    compute_dtype = jnp.bfloat16 if use_bf16 else jnp.float32

    xT = x.T                                       # (F, B): batch on lane axis

    # ---- fuse embedding table with MLP layer 1 weights ----------------------
    # layer1(embed(x)) == M @ stacked_one_hot(x) with
    # M[:, f*V:(f+1)*V] = W1.T[:, f*D:(f+1)*D] @ table.T
    W1T = mlp_weights[0].T.astype(jnp.float32)     # (H1, F*D)
    tableT = table.T.astype(jnp.float32)           # (D, V)
    M = jnp.concatenate(
        [W1T[:, f * D:(f + 1) * D] @ tableT for f in range(F)], axis=1)  # (H1, F*V)
    M = M.astype(compute_dtype)
    b1 = mlp_biases[0].reshape(-1, 1).astype(jnp.float32)                # (H1, 1)

    layer_args, layer_specs = [], []
    for Wt, bt in zip(mlp_weights[1:], mlp_biases[1:]):
        WT = Wt.T.astype(compute_dtype)            # (H_out, H_in)
        bcol = bt.reshape(-1, 1).astype(jnp.float32)
        layer_args += [WT, bcol]
        layer_specs += [
            pl.BlockSpec(WT.shape, lambda i: (0, 0)),
            pl.BlockSpec(bcol.shape, lambda i: (0, 0)),
        ]
    w_out_row = w_out.reshape(1, -1).astype(compute_dtype)               # (1, H_last)
    b_out = b_out.astype(jnp.float32)

    out = pl.pallas_call(
        ncf_kernel,
        out_shape=jax.ShapeDtypeStruct((1, B), jnp.float32),
        grid_spec=pltpu.PrefetchScalarGridSpec(
            num_scalar_prefetch=0,
            grid=(num_tiles,),
            in_specs=[
                pl.BlockSpec((F, tile_b), lambda i: (0, i)),        # per-tile indices
                pl.BlockSpec(M.shape, lambda i: (0, 0)),            # fused table+layer1 (resident)
                pl.BlockSpec(b1.shape, lambda i: (0, 0)),           # layer-1 bias column
                *layer_specs,                                       # remaining layers (resident)
                pl.BlockSpec(w_out_row.shape, lambda i: (0, 0)),    # final layer weight row
                pl.BlockSpec(memory_space=pltpu.MemorySpace.SMEM),  # final layer bias scalar
            ],
            out_specs=pl.BlockSpec((1, tile_b), lambda i: (0, i)),  # lane-dense output slab
        ),
        compiler_params=pltpu.CompilerParams(
            dimension_semantics=("parallel",),        # megacore-shardable batch axis
            vmem_limit_bytes=32 * 1024 * 1024,        # explicit budget, fits v5e/v6e/v7x
        ),
    )(xT, M, b1, *layer_args, w_out_row, b_out)
    return out[0], None                              # == (torch.sigmoid(out), None)


def ncf_reference(x_user, x_item, table, mlp_weights, mlp_biases, w_out, b_out):
    """Pure-JAX f32 reference mirroring the PyTorch NCF forward."""
    x = jnp.concatenate([x_user, x_item], axis=1)
    B = x.shape[0]
    emb = table[x]                            # (B, F, D)
    h = emb.reshape(B, -1)                    # (B, F*D)
    for W, b in zip(mlp_weights, mlp_biases):
        h = jax.nn.relu(h @ W + b)
    logits = h @ w_out + b_out[0]             # (B,)
    return jax.nn.sigmoid(logits)


if __name__ == "__main__":
    key = jax.random.PRNGKey(0)
    B = 1024                     # batch: 2 tiles of 512 -> even split on v7x megacore
    V = 64                       # vocabulary_size
    D = 8                        # embed_dim
    user_fields, item_fields = 2, 2
    F = user_fields + item_fields            # num_fields
    hidden_dims = (64, 32)                   # MLP hidden_dims

    n_keys = 3 + 2 * len(hidden_dims) + 2
    keys = jax.random.split(key, n_keys)
    ki = iter(range(n_keys))

    x_user = jax.random.randint(keys[next(ki)], (B, user_fields), 0, V, dtype=jnp.int32)
    x_item = jax.random.randint(keys[next(ki)], (B, item_fields), 0, V, dtype=jnp.int32)
    table = 0.10 * jax.random.normal(keys[next(ki)], (V, D), jnp.float32)

    mlp_weights, mlp_biases = [], []
    in_dim = F * D
    for h_dim in hidden_dims:
        mlp_weights.append(
            0.10 * jax.random.normal(keys[next(ki)], (in_dim, h_dim), jnp.float32))
        mlp_biases.append(
            0.05 * jax.random.normal(keys[next(ki)], (h_dim,), jnp.float32))
        in_dim = h_dim
    w_out = 0.10 * jax.random.normal(keys[next(ki)], (in_dim,), jnp.float32)
    b_out = 0.05 * jax.random.normal(keys[next(ki)], (1,), jnp.float32)

    out, _ = ncf_forward(x_user, x_item, table, mlp_weights, mlp_biases, w_out, b_out)
    out = jax.block_until_ready(out)
    ref = ncf_reference(x_user, x_item, table, mlp_weights, mlp_biases, w_out, b_out)

    assert out.shape == (B,)
    # bf16 weights / fused table vs f32 reference -> relaxed tolerance.
    np.testing.assert_allclose(np.asarray(out), np.asarray(ref), rtol=1e-2, atol=1e-2)
    print("KERNEL_OK")
</pallas_src>

<mosaic_0001>
module attributes {stable_mosaic.version = 11 : i64} {
  func.func @ncf_kernel(%arg0: i32, %arg1: memref<4x512xi32, #tpu.memory_space<vmem>>, %arg2: memref<64x256xbf16, #tpu.memory_space<vmem>>, %arg3: memref<64x1xf32, #tpu.memory_space<vmem>>, %arg4: memref<32x64xbf16, #tpu.memory_space<vmem>>, %arg5: memref<32x1xf32, #tpu.memory_space<vmem>>, %arg6: memref<1x32xbf16, #tpu.memory_space<vmem>>, %arg7: memref<1xf32, #tpu.memory_space<smem>>, %arg8: memref<1x512xf32, #tpu.memory_space<vmem>>) attributes {dimension_semantics = [#tpu.dimension_semantics<parallel>], iteration_bounds = array<i64: 2>, scalar_prefetch = 0 : i64, scratch_operands = 0 : i64, tpu.core_type = #tpu.core_type<tc>, window_params = [{transform_indices = @transform_0, window_bounds = array<i64: 4, 512>}, {pipeline_mode = #tpu.pipeline_mode<synchronous>, transform_indices = @transform_1, window_bounds = array<i64: 64, 256>}, {pipeline_mode = #tpu.pipeline_mode<synchronous>, transform_indices = @transform_2, window_bounds = array<i64: 64, 1>}, {pipeline_mode = #tpu.pipeline_mode<synchronous>, transform_indices = @transform_3, window_bounds = array<i64: 32, 64>}, {pipeline_mode = #tpu.pipeline_mode<synchronous>, transform_indices = @transform_4, window_bounds = array<i64: 32, 1>}, {pipeline_mode = #tpu.pipeline_mode<synchronous>, transform_indices = @transform_5, window_bounds = array<i64: 1, 32>}, {transform_indices = @transform_6, window_bounds = array<i64: 1>}, {transform_indices = @transform_7, window_bounds = array<i64: 1, 512>}]} {
    %c0 = arith.constant 0 : index
    %c0_0 = arith.constant 0 : index
    %0 = vector.load %arg1[%c0, %c0_0] : memref<4x512xi32, #tpu.memory_space<vmem>>, vector<4x512xi32>
    %1 = tpu.iota {dimensions = array<i32: 0>} : vector<64x512xi32>
    %2 = vector.extract_strided_slice %0 {offsets = [0, 0], sizes = [1, 512], strides = [1, 1]} : vector<4x512xi32> to vector<1x512xi32>
    %3 = vector.broadcast %2 : vector<1x512xi32> to vector<64x512xi32>
    %4 = arith.cmpi eq, %1, %3 : vector<64x512xi32>
    %5 = vector.extract_strided_slice %0 {offsets = [1, 0], sizes = [1, 512], strides = [1, 1]} : vector<4x512xi32> to vector<1x512xi32>
    %6 = vector.broadcast %5 : vector<1x512xi32> to vector<64x512xi32>
    %7 = arith.cmpi eq, %1, %6 : vector<64x512xi32>
    %8 = vector.extract_strided_slice %0 {offsets = [2, 0], sizes = [1, 512], strides = [1, 1]} : vector<4x512xi32> to vector<1x512xi32>
    %9 = vector.broadcast %8 : vector<1x512xi32> to vector<64x512xi32>
    %10 = arith.cmpi eq, %1, %9 : vector<64x512xi32>
    %11 = vector.extract_strided_slice %0 {offsets = [3, 0], sizes = [1, 512], strides = [1, 1]} : vector<4x512xi32> to vector<1x512xi32>
    %12 = vector.broadcast %11 : vector<1x512xi32> to vector<64x512xi32>
    %13 = arith.cmpi eq, %1, %12 : vector<64x512xi32>
    %14 = tpu.concatenate %4, %7, %10, %13 in 0 : vector<64x512xi1>, vector<64x512xi1>, vector<64x512xi1>, vector<64x512xi1> -> vector<256x512xi1>
    %15 = arith.extui %14 : vector<256x512xi1> to vector<256x512xi32>
    %16 = arith.sitofp %15 : vector<256x512xi32> to vector<256x512xf32>
    %17 = arith.truncf %16 : vector<256x512xf32> to vector<256x512xbf16>
    %c0_1 = arith.constant 0 : index
    %c0_2 = arith.constant 0 : index
    %18 = vector.load %arg2[%c0_1, %c0_2] : memref<64x256xbf16, #tpu.memory_space<vmem>>, vector<64x256xbf16>
    %cst = arith.constant dense<0.000000e+00> : vector<64x512xf32>
    %19 = tpu.matmul %18, %17, %cst {dimension_numbers = #tpu.dot_dimension_numbers<[1], [0], [0], [1], [0, 0, 1, 1], [], []>} : vector<64x256xbf16>, vector<256x512xbf16>, vector<64x512xf32> -> vector<64x512xf32>
    %c0_3 = arith.constant 0 : index
    %c0_4 = arith.constant 0 : index
    %20 = vector.load %arg3[%c0_3, %c0_4] : memref<64x1xf32, #tpu.memory_space<vmem>>, vector<64x1xf32>
    %21 = vector.broadcast %20 : vector<64x1xf32> to vector<64x512xf32>
    %22 = arith.addf %19, %21 : vector<64x512xf32>
    %cst_5 = arith.constant 0.000000e+00 : f32
    %23 = vector.broadcast %cst_5 : f32 to vector<64x512xf32>
    %24 = arith.maximumf %22, %23 : vector<64x512xf32>
    %c0_6 = arith.constant 0 : index
    %c0_7 = arith.constant 0 : index
    %25 = vector.load %arg4[%c0_6, %c0_7] : memref<32x64xbf16, #tpu.memory_space<vmem>>, vector<32x64xbf16>
    %26 = arith.truncf %24 : vector<64x512xf32> to vector<64x512xbf16>
    %cst_8 = arith.constant dense<0.000000e+00> : vector<32x512xf32>
    %27 = tpu.matmul %25, %26, %cst_8 {dimension_numbers = #tpu.dot_dimension_numbers<[1], [0], [0], [1], [0, 0, 1, 1], [], []>} : vector<32x64xbf16>, vector<64x512xbf16>, vector<32x512xf32> -> vector<32x512xf32>
    %c0_9 = arith.constant 0 : index
    %c0_10 = arith.constant 0 : index
    %28 = vector.load %arg5[%c0_9, %c0_10] : memref<32x1xf32, #tpu.memory_space<vmem>>, vector<32x1xf32>
    %29 = vector.broadcast %28 : vector<32x1xf32> to vector<32x512xf32>
    %30 = arith.addf %27, %29 : vector<32x512xf32>
    %cst_11 = arith.constant 0.000000e+00 : f32
    %31 = vector.broadcast %cst_11 : f32 to vector<32x512xf32>
    %32 = arith.maximumf %30, %31 : vector<32x512xf32>
    %c0_12 = arith.constant 0 : index
    %c0_13 = arith.constant 0 : index
    %33 = vector.load %arg6[%c0_12, %c0_13] : memref<1x32xbf16, #tpu.memory_space<vmem>>, vector<1x32xbf16>
    %34 = arith.truncf %32 : vector<32x512xf32> to vector<32x512xbf16>
    %cst_14 = arith.constant dense<0.000000e+00> : vector<1x512xf32>
    %35 = tpu.matmul %33, %34, %cst_14 {dimension_numbers = #tpu.dot_dimension_numbers<[1], [0], [0], [1], [0, 0, 1, 1], [], []>} : vector<1x32xbf16>, vector<32x512xbf16>, vector<1x512xf32> -> vector<1x512xf32>
    %c0_15 = arith.constant 0 : index
    %36 = memref.load %arg7[%c0_15] : memref<1xf32, #tpu.memory_space<smem>>
    %37 = vector.broadcast %36 : f32 to vector<1x512xf32>
    %38 = arith.addf %35, %37 : vector<1x512xf32>
    %39 = arith.negf %38 : vector<1x512xf32>
    %40 = math.exp %39 : vector<1x512xf32>
    %cst_16 = arith.constant 1.000000e+00 : f32
    %41 = vector.broadcast %cst_16 : f32 to vector<1x512xf32>
    %42 = arith.addf %41, %40 : vector<1x512xf32>
    %43 = arith.divf %41, %42 : vector<1x512xf32>
    %c0_17 = arith.constant 0 : index
    %c0_18 = arith.constant 0 : index
    %44 = vector.load %arg8[%c0_17, %c0_18] : memref<1x512xf32, #tpu.memory_space<vmem>>, vector<1x512xf32>
    tpu.vector_store %arg8[%c0_17, %c0_18], %43 {strides = array<i32>} : memref<1x512xf32, #tpu.memory_space<vmem>>, vector<1x512xf32>,
    return
  }
  func.func @transform_0(%arg0: i32) -> (i32, i32) {
    %c0_i32 = arith.constant 0 : i32
    %c0_i32_0 = arith.constant 0 : i32
    return %c0_i32, %arg0 : i32, i32
  }
  func.func @transform_1(%arg0: i32) -> (i32, i32) {
    %c0_i32 = arith.constant 0 : i32
    %c0_i32_0 = arith.constant 0 : i32
    %c0_i32_1 = arith.constant 0 : i32
    return %c0_i32, %c0_i32_0 : i32, i32
  }
  func.func @transform_2(%arg0: i32) -> (i32, i32) {
    %c0_i32 = arith.constant 0 : i32
    %c0_i32_0 = arith.constant 0 : i32
    %c0_i32_1 = arith.constant 0 : i32
    return %c0_i32, %c0_i32_0 : i32, i32
  }
  func.func @transform_3(%arg0: i32) -> (i32, i32) {
    %c0_i32 = arith.constant 0 : i32
    %c0_i32_0 = arith.constant 0 : i32
    %c0_i32_1 = arith.constant 0 : i32
    return %c0_i32, %c0_i32_0 : i32, i32
  }
  func.func @transform_4(%arg0: i32) -> (i32, i32) {
    %c0_i32 = arith.constant 0 : i32
    %c0_i32_0 = arith.constant 0 : i32
    %c0_i32_1 = arith.constant 0 : i32
    return %c0_i32, %c0_i32_0 : i32, i32
  }
  func.func @transform_5(%arg0: i32) -> (i32, i32) {
    %c0_i32 = arith.constant 0 : i32
    %c0_i32_0 = arith.constant 0 : i32
    %c0_i32_1 = arith.constant 0 : i32
    return %c0_i32, %c0_i32_0 : i32, i32
  }
  func.func @transform_6(%arg0: i32) -> i32 {
    %c0_i32 = arith.constant 0 : i32
    %c0_i32_0 = arith.constant 0 : i32
    return %c0_i32 : i32
  }
  func.func @transform_7(%arg0: i32) -> (i32, i32) {
    %c0_i32 = arith.constant 0 : i32
    %c0_i32_0 = arith.constant 0 : i32
    return %c0_i32, %arg0 : i32, i32
  }
}

</mosaic_0001>

<llo_original>
// kernel: tpu_custom_call.1
$region0: #{tpu_custom_call.1}
  #allocation0 [shape = 'u32[]', space=smem, size = 0x4, offset = 0x4, fixed_abs, tag = 'smem constant byte address 0x4 - core index']
  #allocation1 [shape = 'u32[72,128]{1,0:T(1,128)}', space=vmem, size = 0x9000, scoped, tag = 'internal scratch']
  #allocation2 [shape = 'f32[1]{0:T(128)S(6)}', space=smem, size = 0x200, scoped, tag = 'scoped memory for tpu_custom_call.1']
  %s0 = inlined_call_operand.vmem [shape: s32[4,1024], index: 0, kind: input, shape index: {}]
  %s1 = inlined_call_operand.vmem [shape: bf16[64,256], index: 1, kind: input, shape index: {}]
  %s2 = inlined_call_operand.vmem [shape: f32[64,1], index: 2, kind: input, shape index: {}]
  %s3 = inlined_call_operand.hbm [shape: bf16[32,64], index: 3, kind: input, shape index: {}]
  %s4 = inlined_call_operand.vmem [shape: f32[32,1], index: 4, kind: input, shape index: {}]
  %s5 = inlined_call_operand.vmem [shape: bf16[1,32], index: 5, kind: input, shape index: {}]
  %s6 = inlined_call_operand.<no memory space> [shape: f32[1], index: 6, kind: input, shape index: {}]
  %s7 = inlined_call_operand.hbm [shape: f32[1,1024], index: 7, kind: output, shape index: {}]
  %s8 = sld [smem:[#allocation0]]
  $region65: #{tpu_custom_call.1} parent=0
    _
  %s10 = ssub.s32 1, %s8
  %s11 = scalar_select 0, %s10, %s8
  %12 = sst [smem:[#allocation2]] %s6
  $region1: #{tpu_custom_call.1} parent=0
    #allocation3 [shape = 'u8[8192]{0}', space=vmem, size = 0x2000, scoped, tag = 'input window, operand 3, single buffered']
    #allocation4 [shape = 's32[2]{0}', space=sflag, size = 0x8, scoped, tag = 'scoped memory for tpu_custom_call.1']
    #allocation5 [shape = 's32[2]{0}', space=sflag, size = 0x8, scoped, tag = 'scoped memory for tpu_custom_call.1']
    #allocation6 [shape = 'u8[4096]{0}', space=vmem, size = 0x1000, scoped, tag = 'output window, operand 0']
    %13 = vsyncpa [#allocation4], 0
    %14 = vsyncpa [#allocation5], 0
    %s15 = scalar_lea.sflag [#allocation5], 1
    %16 = vsyncpa %s15, 0
    loop: start=0, step=1, limit=4
    $region2: #{tpu_custom_call.1} parent=1 // loop_pre_header
      _
    $region3: #{tpu_custom_call.1} parent=1 // loop_header
      %s18 = sphi 0, %s22
      %p19 = scmp.ge.s32.totalorder %s18, 4
      %s28 = sphi 0, %s30
      %s31 = sphi 0, %s28
      %s32 = sphi 0, %s31
      %s48 = sphi 0, %s32
      %s52 = sphi 0, %s52
      %s54 = sphi 0, %s52
      %s55 = sphi 0, %s54
      %s69 = sphi 0, %s55
      %s73 = sphi 0, %s73
      %s75 = sphi 0, %s73
      %s76 = sphi 0, %s75
      %s90 = sphi 0, %s76
      %s94 = sphi 0, %s94
      %s96 = sphi 0, %s94
      %s97 = sphi 0, %s96
      %s111 = sphi 0, %s97
      %s115 = sphi 0, %s115
      %s117 = sphi 0, %s115
      %s118 = sphi 0, %s117
      %s132 = sphi 0, %s118
      %s136 = sphi 0, %s136
      %s138 = sphi 0, %s136
      %s139 = sphi 0, %s138
      %s153 = sphi 0, %s139
      %s157 = sphi 0, %s157
      %s159 = sphi 0, %s157
      %s160 = sphi 0, %s159
      %s174 = sphi 0, %s160
      %s180 = sphi 0, %s182
      %s183 = sphi 0, %s180
      %s184 = sphi 0, %s183
      %s200 = sphi 0, %s184
    $region4: #{tpu_custom_call.1} parent=1 // loop_header_branch
      %21 = sbr.rel (%p19) target = $region8
    $region5: #{tpu_custom_call.1} parent=1 // loop_body
      %s23 = ssub.s32 %s18, 1
      %s24 = ssub.s32 %s18, 2
      %s25 = sadd.s32 %s18, 1
      %s26 = ssub.s32 %s18, %s25
      %p27 = scmp.eq.s32.totalorder %s26, 0
      %s29 = sadd.s32 %s28, 1
      %s30 = scalar_select %p27, %s28, %s29
      %p33 = pneg %p27
      %p34 = scmp.eq.s32.totalorder %s18, 1
      %p35 = por %p33, %p34
      %p36 = scmp.ne.s32.totalorder %s28, %s31
      %p37 = scmp.eq.s32.totalorder %s18, 0
      %p38 = por %p36, %p37
      %p39 = scmp.ne.s32.totalorder %s28, %s31
      %p40 = scmp.eq.s32.totalorder %s23, 1
      %p41 = por %p39, %p40
      %p42 = scmp.ne.s32.totalorder %s31, %s32
      %p43 = scmp.eq.s32.totalorder %s23, 0
      %p44 = por %p42, %p43
      %p45 = scmp.ne.s32.totalorder %s31, %s32
      %p46 = scmp.eq.s32.totalorder %s24, 1
      %p47 = por %p45, %p46
      %p49 = scmp.ne.s32.totalorder %s32, %s48
      %p50 = scmp.eq.s32.totalorder %s24, 0
      %p51 = por %p49, %p50
      %s53 = sadd.s32 %s52, 1
      %p56 = scmp.eq.s32.totalorder %s18, 1
      %p57 = scmp.ne.s32.totalorder %s52, %s54
      %p58 = scmp.eq.s32.totalorder %s18, 0
      %p59 = por %p57, %p58
      %p60 = scmp.ne.s32.totalorder %s52, %s54
      %p61 = scmp.eq.s32.totalorder %s23, 1
      %p62 = por %p60, %p61
      %p63 = scmp.ne.s32.totalorder %s54, %s55
      %p64 = scmp.eq.s32.totalorder %s23, 0
      %p65 = por %p63, %p64
      %p66 = scmp.ne.s32.totalorder %s54, %s55
      %p67 = scmp.eq.s32.totalorder %s24, 1
      %p68 = por %p66, %p67
      %p70 = scmp.ne.s32.totalorder %s55, %s69
      %p71 = scmp.eq.s32.totalorder %s24, 0
      %p72 = por %p70, %p71
      %s74 = sadd.s32 %s73, 1
      %p77 = scmp.eq.s32.totalorder %s18, 1
      %p78 = scmp.ne.s32.totalorder %s73, %s75
      %p79 = scmp.eq.s32.totalorder %s18, 0
      %p80 = por %p78, %p79
      %p81 = scmp.ne.s32.totalorder %s73, %s75
      %p82 = scmp.eq.s32.totalorder %s23, 1
      %p83 = por %p81, %p82
      %p84 = scmp.ne.s32.totalorder %s75, %s76
      %p85 = scmp.eq.s32.totalorder %s23, 0
      %p86 = por %p84, %p85
      %p87 = scmp.ne.s32.totalorder %s75, %s76
      %p88 = scmp.eq.s32.totalorder %s24, 1
      %p89 = por %p87, %p88
      %p91 = scmp.ne.s32.totalorder %s76, %s90
      %p92 = scmp.eq.s32.totalorder %s24, 0
      %p93 = por %p91, %p92
      %s95 = sadd.s32 %s94, 1
      %p98 = scmp.eq.s32.totalorder %s18, 1
      %p99 = scmp.ne.s32.totalorder %s94, %s96
      %p100 = scmp.eq.s32.totalorder %s18, 0
      %p101 = por %p99, %p100
      %p102 = scmp.ne.s32.totalorder %s94, %s96
      %p103 = scmp.eq.s32.totalorder %s23, 1
      %p104 = por %p102, %p103
      %p105 = scmp.ne.s32.totalorder %s96, %s97
      %p106 = scmp.eq.s32.totalorder %s23, 0
      %p107 = por %p105, %p106
      %p108 = scmp.ne.s32.totalorder %s96, %s97
      %p109 = scmp.eq.s32.totalorder %s24, 1
      %p110 = por %p108, %p109
      %p112 = scmp.ne.s32.totalorder %s97, %s111
      %p113 = scmp.eq.s32.totalorder %s24, 0
      %p114 = por %p112, %p113
      %s116 = sadd.s32 %s115, 1
      %p119 = scmp.eq.s32.totalorder %s18, 1
      %p120 = scmp.ne.s32.totalorder %s115, %s117
      %p121 = scmp.eq.s32.totalorder %s18, 0
      %p122 = por %p120, %p121
      %p123 = scmp.ne.s32.totalorder %s115, %s117
      %p124 = scmp.eq.s32.totalorder %s23, 1
      %p125 = por %p123, %p124
      %p126 = scmp.ne.s32.totalorder %s117, %s118
      %p127 = scmp.eq.s32.totalorder %s23, 0
      %p128 = por %p126, %p127
      %p129 = scmp.ne.s32.totalorder %s117, %s118
      %p130 = scmp.eq.s32.totalorder %s24, 1
      %p131 = por %p129, %p130
      %p133 = scmp.ne.s32.totalorder %s118, %s132
      %p134 = scmp.eq.s32.totalorder %s24, 0
      %p135 = por %p133, %p134
      %s137 = sadd.s32 %s136, 1
      %p140 = scmp.eq.s32.totalorder %s18, 1
      %p141 = scmp.ne.s32.totalorder %s136, %s138
      %p142 = scmp.eq.s32.totalorder %s18, 0
      %p143 = por %p141, %p142
      %p144 = scmp.ne.s32.totalorder %s136, %s138
      %p145 = scmp.eq.s32.totalorder %s23, 1
      %p146 = por %p144, %p145
      %p147 = scmp.ne.s32.totalorder %s138, %s139
      %p148 = scmp.eq.s32.totalorder %s23, 0
      %p149 = por %p147, %p148
      %p150 = scmp.ne.s32.totalorder %s138, %s139
      %p151 = scmp.eq.s32.totalorder %s24, 1
      %p152 = por %p150, %p151
      %p154 = scmp.ne.s32.totalorder %s139, %s153
      %p155 = scmp.eq.s32.totalorder %s24, 0
      %p156 = por %p154, %p155
      %s158 = sadd.s32 %s157, 1
      %p161 = scmp.eq.s32.totalorder %s18, 1
      %p162 = scmp.ne.s32.totalorder %s157, %s159
      %p163 = scmp.eq.s32.totalorder %s18, 0
      %p164 = por %p162, %p163
      %p165 = scmp.ne.s32.totalorder %s157, %s159
      %p166 = scmp.eq.s32.totalorder %s23, 1
      %p167 = por %p165, %p166
      %p168 = scmp.ne.s32.totalorder %s159, %s160
      %p169 = scmp.eq.s32.totalorder %s23, 0
      %p170 = por %p168, %p169
      %p171 = scmp.ne.s32.totalorder %s159, %s160
      %p172 = scmp.eq.s32.totalorder %s24, 1
      %p173 = por %p171, %p172
      %p175 = scmp.ne.s32.totalorder %s160, %s174
      %p176 = scmp.eq.s32.totalorder %s24, 0
      %p177 = por %p175, %p176
      %s178 = ssub.s32 %s18, %s25
      %p179 = scmp.eq.s32.totalorder %s178, 0
      %s181 = sadd.s32 %s180, 1
      %s182 = scalar_select %p179, %s180, %s181
      %p185 = pneg %p179
      %p186 = scmp.eq.s32.totalorder %s18, 1
      %p187 = por %p185, %p186
      %p188 = scmp.ne.s32.totalorder %s180, %s183
      %p189 = scmp.eq.s32.totalorder %s18, 0
      %p190 = por %p188, %p189
      %p191 = scmp.ne.s32.totalorder %s180, %s183
      %p192 = scmp.eq.s32.totalorder %s23, 1
      %p193 = por %p191, %p192
      %p194 = scmp.ne.s32.totalorder %s183, %s184
      %p195 = scmp.eq.s32.totalorder %s23, 0
      %p196 = por %p194, %p195
      %p197 = scmp.ne.s32.totalorder %s183, %s184
      %p198 = scmp.eq.s32.totalorder %s24, 1
      %p199 = por %p197, %p198
      %p201 = scmp.ne.s32.totalorder %s184, %s200
      %p202 = scmp.eq.s32.totalorder %s24, 0
      %p203 = por %p201, %p202
      %p204 = scmp.le.s32.totalorder 1, %s18
      %p205 = scmp.lt.s32.totalorder %s18, 3
      %p206 = pnand %p204, %p205
      %p207 = pneg %p206
      // Predicated region
      $region9: #{tpu_custom_call.1} parent=5 // pred_check
        _
      $region10: #{tpu_custom_call.1} parent=5 // pred_check_branch
        %209 = sbr.rel (%p206) target = $region12
      $region11: #{tpu_custom_call.1} parent=5 // pred_region
        %s210 = ssub.s32 %s18, 1
        // Predicated region
        $region13: #{tpu_custom_call.1} parent=11 // pred_check
          %p211 = pneg %p65
        $region14: #{tpu_custom_call.1} parent=11 // pred_check_branch
          %213 = sbr.rel (%p211) target = $region16
        $region15: #{tpu_custom_call.1} parent=11 // pred_region
          _
        $region16: #{tpu_custom_call.1} parent=11 // pred_fallthru
          _
        // Predicated region
        $region17: #{tpu_custom_call.1} parent=11 // pred_check
          %p214 = pneg %p86
        $region18: #{tpu_custom_call.1} parent=11 // pred_check_branch
          %216 = sbr.rel (%p214) target = $region20
        $region19: #{tpu_custom_call.1} parent=11 // pred_region
          _
        $region20: #{tpu_custom_call.1} parent=11 // pred_fallthru
          _
        // Predicated region
        $region21: #{tpu_custom_call.1} parent=11 // pred_check
          %p217 = pneg %p107
        $region22: #{tpu_custom_call.1} parent=11 // pred_check_branch
          %219 = sbr.rel (%p217) target = $region24
        $region23: #{tpu_custom_call.1} parent=11 // pred_region
          %221 = vsyncadd [#allocation4], 0
          %s222 = sshll.u32 %s3, 4
          %s223 = int_to_ptr.hbm [resolvable:$true] %s222
          %s224 = sshll.u32 [#allocation3], 4
          %s225 = int_to_ptr.vmem [resolvable:$true] %s224
          %230 = dma.hbm_to_vmem [thread:$0]  %s223, 256, %s225, [#allocation4], 64, 64, 4
        $region24: #{tpu_custom_call.1} parent=11 // pred_fallthru
          _
        // Predicated region
        $region25: #{tpu_custom_call.1} parent=11 // pred_check
          %p231 = pneg %p128
        $region26: #{tpu_custom_call.1} parent=11 // pred_check_branch
          %233 = sbr.rel (%p231) target = $region28
        $region27: #{tpu_custom_call.1} parent=11 // pred_region
          _
        $region28: #{tpu_custom_call.1} parent=11 // pred_fallthru
          _
        // Predicated region
        $region29: #{tpu_custom_call.1} parent=11 // pred_check
          %p234 = pneg %p149
        $region30: #{tpu_custom_call.1} parent=11 // pred_check_branch
          %236 = sbr.rel (%p234) target = $region32
        $region31: #{tpu_custom_call.1} parent=11 // pred_region
          _
        $region32: #{tpu_custom_call.1} parent=11 // pred_fallthru
          _
        // Predicated region
        $region33: #{tpu_custom_call.1} parent=11 // pred_check
          %p237 = pneg %p170
        $region34: #{tpu_custom_call.1} parent=11 // pred_check_branch
          %239 = sbr.rel (%p237) target = $region36
        $region35: #{tpu_custom_call.1} parent=11 // pred_region
          _
        $region36: #{tpu_custom_call.1} parent=11 // pred_fallthru
          _
      $region12: #{tpu_custom_call.1} parent=5 // pred_fallthru
        _
      %p240 = scmp.lt.s32.totalorder %s18, 2
      // Predicated region
      $region37: #{tpu_custom_call.1} parent=5 // pred_check
        %p241 = pneg %p240
      $region38: #{tpu_custom_call.1} parent=5 // pred_check_branch
        %243 = sbr.rel (%p241) target = $region40
      $region39: #{tpu_custom_call.1} parent=5 // pred_region
        // Predicated region
        $region41: #{tpu_custom_call.1} parent=39 // pred_check
          %p244 = pneg %p38
        $region42: #{tpu_custom_call.1} parent=39 // pred_check_branch
          %246 = sbr.rel (%p244) target = $region44
        $region43: #{tpu_custom_call.1} parent=39 // pred_region
          %s247 = smul.u32 4, %s18
          %p248 = scmp.lt.s32.totalorder %s247, 7
          %s249 = scalar_select %p248, %s247, 7
          %s250 = smul.addr %s249, 4
          %s251 = scalar_lea.vmem %s0, %s250
          %s252 = smul.u32 4, %s18
        $region44: #{tpu_custom_call.1} parent=39 // pred_fallthru
          _
      $region40: #{tpu_custom_call.1} parent=5 // pred_fallthru
        _
      %p253 = scmp.le.s32.totalorder 1, %s18
      %p254 = scmp.lt.s32.totalorder %s18, 3
      %p255 = pnand %p253, %p254
      %p256 = pneg %p255
      // Predicated region
      $region45: #{tpu_custom_call.1} parent=5 // pred_check
        _
      $region46: #{tpu_custom_call.1} parent=5 // pred_check_branch
        %258 = sbr.rel (%p255) target = $region48
      $region47: #{tpu_custom_call.1} parent=5 // pred_region
        %s259 = ssub.s32 %s18, 1
        // Predicated region
        $region49: #{tpu_custom_call.1} parent=47 // pred_check
          %p260 = pneg %p107
        $region50: #{tpu_custom_call.1} parent=47 // pred_check_branch
          %262 = sbr.rel (%p260) target = $region52
        $region51: #{tpu_custom_call.1} parent=47 // pred_region
          %264 = dma.done [#allocation4], 256
        $region52: #{tpu_custom_call.1} parent=47 // pred_fallthru
          _
        %s265 = smul.u32 4, %s23
        %p266 = scmp.lt.s32.totalorder %s265, 7
        %s267 = scalar_select %p266, %s265, 7
        %s268 = smul.addr %s267, 4
        %s269 = scalar_lea.vmem %s0, %s268
        %p270 = pneg %p44
        %p271 = pneg %p41
        %p272 = pneg %p65
        %p273 = pneg %p62
        %p274 = pneg %p86
        %p275 = pneg %p83
        %p276 = pneg %p107
        %p277 = pneg %p104
        %p278 = pneg %p128
        %p279 = pneg %p125
        %p280 = pneg %p149
        %p281 = pneg %p146
        %p282 = pneg %p170
        %p283 = pneg %p167
        %p284 = pneg %p196
        %p285 = pneg %p193
        %s286 = sand.u32 %s183, 1
        %s287 = scalar_lea.sflag [#allocation5], %s286
        %s288 = sand.u32 %s183, 1
        %s289 = smul.addr %s288, 4
        %s290 = scalar_lea.vmem [#allocation6], %s289
        %s291 = smul.u32 4, %s23
        %p292 = scmp.lt.s32.totalorder %s291, 7
        %s293 = scalar_select %p292, %s291, 7
        %s294 = smul.addr %s293, 4
        %s295 = scalar_lea.vmem %s0, %s294
        %s296 = smul.u32 4, %s23
        %s297 = smul.u32 4, %s23
        %v299 = vld [vmem:[%s295] sm:$0xff]
        %v300 = vld [vmem:[%s295 + $0x8] sm:$0xff]
        %v301 = vlaneseq
        %v302 = vshrl.u32 %v301, 7
        %v303 = vadd.s32 %v302, 8
        %v304 = vadd.s32 %v302, 16
        %v305 = vadd.s32 %v302, 24
        %v306 = vadd.s32 %v302, 32
        %v307 = vadd.s32 %v302, 40
        %v308 = vadd.s32 %v302, 48
        %v309 = vadd.s32 %v302, 56
        %v310 = vperm.slane %v299, 0
        %v311 = vperm.slane %v299, 4
        %v312 = vperm.slane %v300, 0
        %v313 = vperm.slane %v300, 4
        %v314 = vperm.slane %v310, 0
        %v315 = vperm.slane %v311, 0
        %v316 = vperm.slane %v312, 0
        %v317 = vperm.slane %v313, 0
        %vm318 = vcmp.eq.s32.totalorder %v302, %v314
        %vm319 = vcmp.eq.s32.totalorder %v302, %v315
        %vm320 = vcmp.eq.s32.totalorder %v302, %v316
        %vm321 = vcmp.eq.s32.totalorder %v302, %v317
        %vm322 = vcmp.eq.s32.totalorder %v303, %v314
        %vm323 = vcmp.eq.s32.totalorder %v303, %v315
        %vm324 = vcmp.eq.s32.totalorder %v303, %v316
        %vm325 = vcmp.eq.s32.totalorder %v303, %v317
        %vm326 = vcmp.eq.s32.totalorder %v304, %v314
        %vm327 = vcmp.eq.s32.totalorder %v304, %v315
        %vm328 = vcmp.eq.s32.totalorder %v304, %v316
        %vm329 = vcmp.eq.s32.totalorder %v304, %v317
        %vm330 = vcmp.eq.s32.totalorder %v305, %v314
        %vm331 = vcmp.eq.s32.totalorder %v305, %v315
        %vm332 = vcmp.eq.s32.totalorder %v305, %v316
        %vm333 = vcmp.eq.s32.totalorder %v305, %v317
        %vm334 = vcmp.eq.s32.totalorder %v306, %v314
        %vm335 = vcmp.eq.s32.totalorder %v306, %v315
        %vm336 = vcmp.eq.s32.totalorder %v306, %v316
        %vm337 = vcmp.eq.s32.totalorder %v306, %v317
        %vm338 = vcmp.eq.s32.totalorder %v307, %v314
        %vm339 = vcmp.eq.s32.totalorder %v307, %v315
        %vm340 = vcmp.eq.s32.totalorder %v307, %v316
        %vm341 = vcmp.eq.s32.totalorder %v307, %v317
        %vm342 = vcmp.eq.s32.totalorder %v308, %v314
        %vm343 = vcmp.eq.s32.totalorder %v308, %v315
        %vm344 = vcmp.eq.s32.totalorder %v308, %v316
        %vm345 = vcmp.eq.s32.totalorder %v308, %v317
        %vm346 = vcmp.eq.s32.totalorder %v309, %v314
        %vm347 = vcmp.eq.s32.totalorder %v309, %v315
        %vm348 = vcmp.eq.s32.totalorder %v309, %v316
        %vm349 = vcmp.eq.s32.totalorder %v309, %v317
        %v350 = vperm.slane %v299, 1
        %v351 = vperm.slane %v299, 5
        %v352 = vperm.slane %v300, 1
        %v353 = vperm.slane %v300, 5
        %v354 = vperm.slane %v350, 1
        %v355 = vperm.slane %v351, 1
        %v356 = vperm.slane %v352, 1
        %v357 = vperm.slane %v353, 1
        %vm358 = vcmp.eq.s32.totalorder %v302, %v354
        %vm359 = vcmp.eq.s32.totalorder %v302, %v355
        %vm360 = vcmp.eq.s32.totalorder %v302, %v356
        %vm361 = vcmp.eq.s32.totalorder %v302, %v357
        %vm362 = vcmp.eq.s32.totalorder %v303, %v354
        %vm363 = vcmp.eq.s32.totalorder %v303, %v355
        %vm364 = vcmp.eq.s32.totalorder %v303, %v356
        %vm365 = vcmp.eq.s32.totalorder %v303, %v357
        %vm366 = vcmp.eq.s32.totalorder %v304, %v354
        %vm367 = vcmp.eq.s32.totalorder %v304, %v355
        %vm368 = vcmp.eq.s32.totalorder %v304, %v356
        %vm369 = vcmp.eq.s32.totalorder %v304, %v357
        %vm370 = vcmp.eq.s32.totalorder %v305, %v354
        %vm371 = vcmp.eq.s32.totalorder %v305, %v355
        %vm372 = vcmp.eq.s32.totalorder %v305, %v356
        %vm373 = vcmp.eq.s32.totalorder %v305, %v357
        %vm374 = vcmp.eq.s32.totalorder %v306, %v354
        %vm375 = vcmp.eq.s32.totalorder %v306, %v355
        %vm376 = vcmp.eq.s32.totalorder %v306, %v356
        %vm377 = vcmp.eq.s32.totalorder %v306, %v357
        %vm378 = vcmp.eq.s32.totalorder %v307, %v354
        %vm379 = vcmp.eq.s32.totalorder %v307, %v355
        %vm380 = vcmp.eq.s32.totalorder %v307, %v356
        %vm381 = vcmp.eq.s32.totalorder %v307, %v357
        %vm382 = vcmp.eq.s32.totalorder %v308, %v354
        %vm383 = vcmp.eq.s32.totalorder %v308, %v355
        %vm384 = vcmp.eq.s32.totalorder %v308, %v356
        %vm385 = vcmp.eq.s32.totalorder %v308, %v357
        %vm386 = vcmp.eq.s32.totalorder %v309, %v354
        %vm387 = vcmp.eq.s32.totalorder %v309, %v355
        %vm388 = vcmp.eq.s32.totalorder %v309, %v356
        %vm389 = vcmp.eq.s32.totalorder %v309, %v357
        %v390 = vperm.slane %v299, 2
        %v391 = vperm.slane %v299, 6
        %v392 = vperm.slane %v300, 2
        %v393 = vperm.slane %v300, 6
        %v394 = vperm.slane %v390, 2
        %v395 = vperm.slane %v391, 2
        %v396 = vperm.slane %v392, 2
        %v397 = vperm.slane %v393, 2
        %vm398 = vcmp.eq.s32.totalorder %v302, %v394
        %vm399 = vcmp.eq.s32.totalorder %v302, %v395
        %vm400 = vcmp.eq.s32.totalorder %v302, %v396
        %vm401 = vcmp.eq.s32.totalorder %v302, %v397
        %vm402 = vcmp.eq.s32.totalorder %v303, %v394
        %vm403 = vcmp.eq.s32.totalorder %v303, %v395
        %vm404 = vcmp.eq.s32.totalorder %v303, %v396
        %vm405 = vcmp.eq.s32.totalorder %v303, %v397
        %vm406 = vcmp.eq.s32.totalorder %v304, %v394
        %vm407 = vcmp.eq.s32.totalorder %v304, %v395
        %vm408 = vcmp.eq.s32.totalorder %v304, %v396
        %vm409 = vcmp.eq.s32.totalorder %v304, %v397
        %vm410 = vcmp.eq.s32.totalorder %v305, %v394
        %vm411 = vcmp.eq.s32.totalorder %v305, %v395
        %vm412 = vcmp.eq.s32.totalorder %v305, %v396
        %vm413 = vcmp.eq.s32.totalorder %v305, %v397
        %vm414 = vcmp.eq.s32.totalorder %v306, %v394
        %vm415 = vcmp.eq.s32.totalorder %v306, %v395
        %vm416 = vcmp.eq.s32.totalorder %v306, %v396
        %vm417 = vcmp.eq.s32.totalorder %v306, %v397
        %vm418 = vcmp.eq.s32.totalorder %v307, %v394
        %vm419 = vcmp.eq.s32.totalorder %v307, %v395
        %vm420 = vcmp.eq.s32.totalorder %v307, %v396
        %vm421 = vcmp.eq.s32.totalorder %v307, %v397
        %vm422 = vcmp.eq.s32.totalorder %v308, %v394
        %vm423 = vcmp.eq.s32.totalorder %v308, %v395
        %vm424 = vcmp.eq.s32.totalorder %v308, %v396
        %vm425 = vcmp.eq.s32.totalorder %v308, %v397
        %vm426 = vcmp.eq.s32.totalorder %v309, %v394
        %vm427 = vcmp.eq.s32.totalorder %v309, %v395
        %vm428 = vcmp.eq.s32.totalorder %v309, %v396
        %vm429 = vcmp.eq.s32.totalorder %v309, %v397
        %v430 = vperm.slane %v299, 3
        %v431 = vperm.slane %v299, 7
        %v432 = vperm.slane %v300, 3
        %v433 = vperm.slane %v300, 7
        %v434 = vperm.slane %v430, 3
        %v435 = vperm.slane %v431, 3
        %v436 = vperm.slane %v432, 3
        %v437 = vperm.slane %v433, 3
        %vm438 = vcmp.eq.s32.totalorder %v302, %v434
        %vm439 = vcmp.eq.s32.totalorder %v302, %v435
        %vm440 = vcmp.eq.s32.totalorder %v302, %v436
        %vm441 = vcmp.eq.s32.totalorder %v302, %v437
        %vm442 = vcmp.eq.s32.totalorder %v303, %v434
        %vm443 = vcmp.eq.s32.totalorder %v303, %v435
        %vm444 = vcmp.eq.s32.totalorder %v303, %v436
        %vm445 = vcmp.eq.s32.totalorder %v303, %v437
        %vm446 = vcmp.eq.s32.totalorder %v304, %v434
        %vm447 = vcmp.eq.s32.totalorder %v304, %v435
        %vm448 = vcmp.eq.s32.totalorder %v304, %v436
        %vm449 = vcmp.eq.s32.totalorder %v304, %v437
        %vm450 = vcmp.eq.s32.totalorder %v305, %v434
        %vm451 = vcmp.eq.s32.totalorder %v305, %v435
        %vm452 = vcmp.eq.s32.totalorder %v305, %v436
        %vm453 = vcmp.eq.s32.totalorder %v305, %v437
        %vm454 = vcmp.eq.s32.totalorder %v306, %v434
        %vm455 = vcmp.eq.s32.totalorder %v306, %v435
        %vm456 = vcmp.eq.s32.totalorder %v306, %v436
        %vm457 = vcmp.eq.s32.totalorder %v306, %v437
        %vm458 = vcmp.eq.s32.totalorder %v307, %v434
        %vm459 = vcmp.eq.s32.totalorder %v307, %v435
        %vm460 = vcmp.eq.s32.totalorder %v307, %v436
        %vm461 = vcmp.eq.s32.totalorder %v307, %v437
        %vm462 = vcmp.eq.s32.totalorder %v308, %v434
        %vm463 = vcmp.eq.s32.totalorder %v308, %v435
        %vm464 = vcmp.eq.s32.totalorder %v308, %v436
        %vm465 = vcmp.eq.s32.totalorder %v308, %v437
        %vm466 = vcmp.eq.s32.totalorder %v309, %v434
        %vm467 = vcmp.eq.s32.totalorder %v309, %v435
        %vm468 = vcmp.eq.s32.totalorder %v309, %v436
        %vm469 = vcmp.eq.s32.totalorder %v309, %v437
        %v470 = vsel %vm318, 1, 0
        %v471 = vsel %vm319, 1, 0
        %v472 = vsel %vm320, 1, 0
        %v473 = vsel %vm321, 1, 0
        %v474 = vsel %vm322, 1, 0
        %v475 = vsel %vm323, 1, 0
        %v476 = vsel %vm324, 1, 0
        %v477 = vsel %vm325, 1, 0
        %v478 = vsel %vm326, 1, 0
        %v479 = vsel %vm327, 1, 0
        %v480 = vsel %vm328, 1, 0
        %v481 = vsel %vm329, 1, 0
        %v482 = vsel %vm330, 1, 0
        %v483 = vsel %vm331, 1, 0
        %v484 = vsel %vm332, 1, 0
        %v485 = vsel %vm333, 1, 0
        %v486 = vsel %vm334, 1, 0
        %v487 = vsel %vm335, 1, 0
        %v488 = vsel %vm336, 1, 0
        %v489 = vsel %vm337, 1, 0
        %v490 = vsel %vm338, 1, 0
        %v491 = vsel %vm339, 1, 0
        %v492 = vsel %vm340, 1, 0
        %v493 = vsel %vm341, 1, 0
        %v494 = vsel %vm342, 1, 0
        %v495 = vsel %vm343, 1, 0
        %v496 = vsel %vm344, 1, 0
        %v497 = vsel %vm345, 1, 0
        %v498 = vsel %vm346, 1, 0
        %v499 = vsel %vm347, 1, 0
        %v500 = vsel %vm348, 1, 0
        %v501 = vsel %vm349, 1, 0
        %v502 = vsel %vm358, 1, 0
        %v503 = vsel %vm359, 1, 0
        %v504 = vsel %vm360, 1, 0
        %v505 = vsel %vm361, 1, 0
        %v506 = vsel %vm362, 1, 0
        %v507 = vsel %vm363, 1, 0
        %v508 = vsel %vm364, 1, 0
        %v509 = vsel %vm365, 1, 0
        %v510 = vsel %vm366, 1, 0
        %v511 = vsel %vm367, 1, 0
        %v512 = vsel %vm368, 1, 0
        %v513 = vsel %vm369, 1, 0
        %v514 = vsel %vm370, 1, 0
        %v515 = vsel %vm371, 1, 0
        %v516 = vsel %vm372, 1, 0
        %v517 = vsel %vm373, 1, 0
        %v518 = vsel %vm374, 1, 0
        %v519 = vsel %vm375, 1, 0
        %v520 = vsel %vm376, 1, 0
        %v521 = vsel %vm377, 1, 0
        %v522 = vsel %vm378, 1, 0
        %v523 = vsel %vm379, 1, 0
        %v524 = vsel %vm380, 1, 0
        %v525 = vsel %vm381, 1, 0
        %v526 = vsel %vm382, 1, 0
        %v527 = vsel %vm383, 1, 0
        %v528 = vsel %vm384, 1, 0
        %v529 = vsel %vm385, 1, 0
        %v530 = vsel %vm386, 1, 0
        %v531 = vsel %vm387, 1, 0
        %v532 = vsel %vm388, 1, 0
        %v533 = vsel %vm389, 1, 0
        %v534 = vsel %vm398, 1, 0
        %v535 = vsel %vm399, 1, 0
        %v536 = vsel %vm400, 1, 0
        %v537 = vsel %vm401, 1, 0
        %v538 = vsel %vm402, 1, 0
        %v539 = vsel %vm403, 1, 0
        %v540 = vsel %vm404, 1, 0
        %v541 = vsel %vm405, 1, 0
        %v542 = vsel %vm406, 1, 0
        %v543 = vsel %vm407, 1, 0
        %v544 = vsel %vm408, 1, 0
        %v545 = vsel %vm409, 1, 0
        %v546 = vsel %vm410, 1, 0
        %v547 = vsel %vm411, 1, 0
        %v548 = vsel %vm412, 1, 0
        %v549 = vsel %vm413, 1, 0
        %v550 = vsel %vm414, 1, 0
        %v551 = vsel %vm415, 1, 0
        %v552 = vsel %vm416, 1, 0
        %v553 = vsel %vm417, 1, 0
        %v554 = vsel %vm418, 1, 0
        %v555 = vsel %vm419, 1, 0
        %v556 = vsel %vm420, 1, 0
        %v557 = vsel %vm421, 1, 0
        %v558 = vsel %vm422, 1, 0
        %v559 = vsel %vm423, 1, 0
        %v560 = vsel %vm424, 1, 0
        %v561 = vsel %vm425, 1, 0
        %v562 = vsel %vm426, 1, 0
        %v563 = vsel %vm427, 1, 0
        %v564 = vsel %vm428, 1, 0
        %v565 = vsel %vm429, 1, 0
        %v566 = vsel %vm438, 1, 0
        %v567 = vsel %vm439, 1, 0
        %v568 = vsel %vm440, 1, 0
        %v569 = vsel %vm441, 1, 0
        %v570 = vsel %vm442, 1, 0
        %v571 = vsel %vm443, 1, 0
        %v572 = vsel %vm444, 1, 0
        %v573 = vsel %vm445, 1, 0
        %v574 = vsel %vm446, 1, 0
        %v575 = vsel %vm447, 1, 0
        %v576 = vsel %vm448, 1, 0
        %v577 = vsel %vm449, 1, 0
        %v578 = vsel %vm450, 1, 0
        %v579 = vsel %vm451, 1, 0
        %v580 = vsel %vm452, 1, 0
        %v581 = vsel %vm453, 1, 0
        %v582 = vsel %vm454, 1, 0
        %v583 = vsel %vm455, 1, 0
        %v584 = vsel %vm456, 1, 0
        %v585 = vsel %vm457, 1, 0
        %v586 = vsel %vm458, 1, 0
        %v587 = vsel %vm459, 1, 0
        %v588 = vsel %vm460, 1, 0
        %v589 = vsel %vm461, 1, 0
        %v590 = vsel %vm462, 1, 0
        %v591 = vsel %vm463, 1, 0
        %v592 = vsel %vm464, 1, 0
        %v593 = vsel %vm465, 1, 0
        %v594 = vsel %vm466, 1, 0
        %v595 = vsel %vm467, 1, 0
        %v596 = vsel %vm468, 1, 0
        %v597 = vsel %vm469, 1, 0
        %v598 = vcvt.s32.f32 %v470
        %v599 = vcvt.s32.f32 %v471
        %v600 = vcvt.s32.f32 %v472
        %v601 = vcvt.s32.f32 %v473
        %v602 = vcvt.s32.f32 %v474
        %v603 = vcvt.s32.f32 %v475
        %v604 = vcvt.s32.f32 %v476
        %v605 = vcvt.s32.f32 %v477
        %v606 = vcvt.s32.f32 %v478
        %v607 = vcvt.s32.f32 %v479
        %v608 = vcvt.s32.f32 %v480
        %v609 = vcvt.s32.f32 %v481
        %v610 = vcvt.s32.f32 %v482
        %v611 = vcvt.s32.f32 %v483
        %v612 = vcvt.s32.f32 %v484
        %v613 = vcvt.s32.f32 %v485
        %v614 = vcvt.s32.f32 %v486
        %v615 = vcvt.s32.f32 %v487
        %v616 = vcvt.s32.f32 %v488
        %v617 = vcvt.s32.f32 %v489
        %v618 = vcvt.s32.f32 %v490
        %v619 = vcvt.s32.f32 %v491
        %v620 = vcvt.s32.f32 %v492
        %v621 = vcvt.s32.f32 %v493
        %v622 = vcvt.s32.f32 %v494
        %v623 = vcvt.s32.f32 %v495
        %v624 = vcvt.s32.f32 %v496
        %v625 = vcvt.s32.f32 %v497
        %v626 = vcvt.s32.f32 %v498
        %v627 = vcvt.s32.f32 %v499
        %v628 = vcvt.s32.f32 %v500
        %v629 = vcvt.s32.f32 %v501
        %v630 = vcvt.s32.f32 %v502
        %v631 = vcvt.s32.f32 %v503
        %v632 = vcvt.s32.f32 %v504
        %v633 = vcvt.s32.f32 %v505
        %v634 = vcvt.s32.f32 %v506
        %v635 = vcvt.s32.f32 %v507
        %v636 = vcvt.s32.f32 %v508
        %v637 = vcvt.s32.f32 %v509
        %v638 = vcvt.s32.f32 %v510
        %v639 = vcvt.s32.f32 %v511
        %v640 = vcvt.s32.f32 %v512
        %v641 = vcvt.s32.f32 %v513
        %v642 = vcvt.s32.f32 %v514
        %v643 = vcvt.s32.f32 %v515
        %v644 = vcvt.s32.f32 %v516
        %v645 = vcvt.s32.f32 %v517
        %v646 = vcvt.s32.f32 %v518
        %v647 = vcvt.s32.f32 %v519
        %v648 = vcvt.s32.f32 %v520
        %v649 = vcvt.s32.f32 %v521
        %v650 = vcvt.s32.f32 %v522
        %v651 = vcvt.s32.f32 %v523
        %v652 = vcvt.s32.f32 %v524
        %v653 = vcvt.s32.f32 %v525
        %v654 = vcvt.s32.f32 %v526
        %v655 = vcvt.s32.f32 %v527
        %v656 = vcvt.s32.f32 %v528
        %v657 = vcvt.s32.f32 %v529
        %v658 = vcvt.s32.f32 %v530
        %v659 = vcvt.s32.f32 %v531
        %v660 = vcvt.s32.f32 %v532
        %v661 = vcvt.s32.f32 %v533
        %v662 = vcvt.s32.f32 %v534
        %v663 = vcvt.s32.f32 %v535
        %v664 = vcvt.s32.f32 %v536
        %v665 = vcvt.s32.f32 %v537
        %v666 = vcvt.s32.f32 %v538
        %v667 = vcvt.s32.f32 %v539
        %v668 = vcvt.s32.f32 %v540
        %v669 = vcvt.s32.f32 %v541
        %v670 = vcvt.s32.f32 %v542
        %v671 = vcvt.s32.f32 %v543
        %v672 = vcvt.s32.f32 %v544
        %v673 = vcvt.s32.f32 %v545
        %v674 = vcvt.s32.f32 %v546
        %v675 = vcvt.s32.f32 %v547
        %v676 = vcvt.s32.f32 %v548
        %v677 = vcvt.s32.f32 %v549
        %v678 = vcvt.s32.f32 %v550
        %v679 = vcvt.s32.f32 %v551
        %v680 = vcvt.s32.f32 %v552
        %v681 = vcvt.s32.f32 %v553
        %v682 = vcvt.s32.f32 %v554
        %v683 = vcvt.s32.f32 %v555
        %v684 = vcvt.s32.f32 %v556
        %v685 = vcvt.s32.f32 %v557
        %v686 = vcvt.s32.f32 %v558
        %v687 = vcvt.s32.f32 %v559
        %v688 = vcvt.s32.f32 %v560
        %v689 = vcvt.s32.f32 %v561
        %v690 = vcvt.s32.f32 %v562
        %v691 = vcvt.s32.f32 %v563
        %v692 = vcvt.s32.f32 %v564
        %v693 = vcvt.s32.f32 %v565
        %v694 = vcvt.s32.f32 %v566
        %v695 = vcvt.s32.f32 %v567
        %v696 = vcvt.s32.f32 %v568
        %v697 = vcvt.s32.f32 %v569
        %v698 = vcvt.s32.f32 %v570
        %v699 = vcvt.s32.f32 %v571
        %v700 = vcvt.s32.f32 %v572
        %v701 = vcvt.s32.f32 %v573
        %v702 = vcvt.s32.f32 %v574
        %v703 = vcvt.s32.f32 %v575
        %v704 = vcvt.s32.f32 %v576
        %v705 = vcvt.s32.f32 %v577
        %v706 = vcvt.s32.f32 %v578
        %v707 = vcvt.s32.f32 %v579
        %v708 = vcvt.s32.f32 %v580
        %v709 = vcvt.s32.f32 %v581
        %v710 = vcvt.s32.f32 %v582
        %v711 = vcvt.s32.f32 %v583
        %v712 = vcvt.s32.f32 %v584
        %v713 = vcvt.s32.f32 %v585
        %v714 = vcvt.s32.f32 %v586
        %v715 = vcvt.s32.f32 %v587
        %v716 = vcvt.s32.f32 %v588
        %v717 = vcvt.s32.f32 %v589
        %v718 = vcvt.s32.f32 %v590
        %v719 = vcvt.s32.f32 %v591
        %v720 = vcvt.s32.f32 %v592
        %v721 = vcvt.s32.f32 %v593
        %v722 = vcvt.s32.f32 %v594
        %v723 = vcvt.s32.f32 %v595
        %v724 = vcvt.s32.f32 %v596
        %v725 = vcvt.s32.f32 %v597
        %v726 = vpack.c.bf16 %v602, %v598
        %v727 = vpack.c.bf16 %v603, %v599
        %v728 = vpack.c.bf16 %v604, %v600
        %v729 = vpack.c.bf16 %v605, %v601
        %v730 = vpack.c.bf16 %v610, %v606
        %v731 = vpack.c.bf16 %v611, %v607
        %v732 = vpack.c.bf16 %v612, %v608
        %v733 = vpack.c.bf16 %v613, %v609
        %v734 = vpack.c.bf16 %v618, %v614
        %v735 = vpack.c.bf16 %v619, %v615
        %v736 = vpack.c.bf16 %v620, %v616
        %v737 = vpack.c.bf16 %v621, %v617
        %v738 = vpack.c.bf16 %v626, %v622
        %v739 = vpack.c.bf16 %v627, %v623
        %v740 = vpack.c.bf16 %v628, %v624
        %v741 = vpack.c.bf16 %v629, %v625
        %v742 = vpack.c.bf16 %v634, %v630
        %v743 = vpack.c.bf16 %v635, %v631
        %v744 = vpack.c.bf16 %v636, %v632
        %v745 = vpack.c.bf16 %v637, %v633
        %v746 = vpack.c.bf16 %v642, %v638
        %v747 = vpack.c.bf16 %v643, %v639
        %v748 = vpack.c.bf16 %v644, %v640
        %v749 = vpack.c.bf16 %v645, %v641
        %v750 = vpack.c.bf16 %v650, %v646
        %v751 = vpack.c.bf16 %v651, %v647
        %v752 = vpack.c.bf16 %v652, %v648
        %v753 = vpack.c.bf16 %v653, %v649
        %v754 = vpack.c.bf16 %v658, %v654
        %v755 = vpack.c.bf16 %v659, %v655
        %v756 = vpack.c.bf16 %v660, %v656
        %v757 = vpack.c.bf16 %v661, %v657
        %v758 = vpack.c.bf16 %v666, %v662
        %v759 = vpack.c.bf16 %v667, %v663
        %v760 = vpack.c.bf16 %v668, %v664
        %v761 = vpack.c.bf16 %v669, %v665
        %v762 = vpack.c.bf16 %v674, %v670
        %v763 = vpack.c.bf16 %v675, %v671
        %v764 = vpack.c.bf16 %v676, %v672
        %v765 = vpack.c.bf16 %v677, %v673
        %v766 = vpack.c.bf16 %v682, %v678
        %v767 = vpack.c.bf16 %v683, %v679
        %v768 = vpack.c.bf16 %v684, %v680
        %v769 = vpack.c.bf16 %v685, %v681
        %v770 = vpack.c.bf16 %v690, %v686
        %v771 = vpack.c.bf16 %v691, %v687
        %v772 = vpack.c.bf16 %v692, %v688
        %v773 = vpack.c.bf16 %v693, %v689
        %v774 = vpack.c.bf16 %v698, %v694
        %v775 = vpack.c.bf16 %v699, %v695
        %v776 = vpack.c.bf16 %v700, %v696
        %v777 = vpack.c.bf16 %v701, %v697
        %v778 = vpack.c.bf16 %v706, %v702
        %v779 = vpack.c.bf16 %v707, %v703
        %v780 = vpack.c.bf16 %v708, %v704
        %v781 = vpack.c.bf16 %v709, %v705
        %v782 = vpack.c.bf16 %v714, %v710
        %v783 = vpack.c.bf16 %v715, %v711
        %v784 = vpack.c.bf16 %v716, %v712
        %v785 = vpack.c.bf16 %v717, %v713
        %v786 = vpack.c.bf16 %v722, %v718
        %v787 = vpack.c.bf16 %v723, %v719
        %v788 = vpack.c.bf16 %v724, %v720
        %v789 = vpack.c.bf16 %v725, %v721
        %v790 = vld [vmem:[%s1] sm:$0xff]
        %v791 = vld [vmem:[%s1 + $0x8] sm:$0xff]
        %v792 = vld [vmem:[%s1 + $0x10] sm:$0xff]
        %v793 = vld [vmem:[%s1 + $0x18] sm:$0xff]
        %v794 = vld [vmem:[%s1 + $0x20] sm:$0xff]
        %v795 = vld [vmem:[%s1 + $0x28] sm:$0xff]
        %v796 = vld [vmem:[%s1 + $0x30] sm:$0xff]
        %v797 = vld [vmem:[%s1 + $0x38] sm:$0xff]
        %v798 = vld [vmem:[%s2] sm:$0xff]
        %v799 = vld [vmem:[%s2 + $0x8] sm:$0xff]
        %v800 = vld [vmem:[%s2 + $0x10] sm:$0xff]
        %v801 = vld [vmem:[%s2 + $0x18] sm:$0xff]
        %v802 = vld [vmem:[%s2 + $0x20] sm:$0xff]
        %v803 = vld [vmem:[%s2 + $0x28] sm:$0xff]
        %v804 = vld [vmem:[%s2 + $0x30] sm:$0xff]
        %v805 = vld [vmem:[%s2 + $0x38] sm:$0xff]
        %807 = vset.pattern.permute.xlu0 0
        %808 = vperm.xlu0 %807, %v798
        %v809 = vpop.permute.xlu0 %808
        %812 = vset.pattern.permute.xlu0 0
        %813 = vperm.xlu0 %812, %v799
        %v814 = vpop.permute.xlu0 %813
        %817 = vset.pattern.permute.xlu0 0
        %818 = vperm.xlu0 %817, %v800
        %v819 = vpop.permute.xlu0 %818
        %822 = vset.pattern.permute.xlu0 0
        %823 = vperm.xlu0 %822, %v801
        %v824 = vpop.permute.xlu0 %823
        %827 = vset.pattern.permute.xlu0 0
        %828 = vperm.xlu0 %827, %v802
        %v829 = vpop.permute.xlu0 %828
        %832 = vset.pattern.permute.xlu0 0
        %833 = vperm.xlu0 %832, %v803
        %v834 = vpop.permute.xlu0 %833
        %837 = vset.pattern.permute.xlu0 0
        %838 = vperm.xlu0 %837, %v804
        %v839 = vpop.permute.xlu0 %838
        %842 = vset.pattern.permute.xlu0 0
        %843 = vperm.xlu0 %842, %v805
        %v844 = vpop.permute.xlu0 %843
        %v854 = vunpack.c.l.b16 %v790
        %v855 = vunpack.c.h.b16 %v790
        %v856 = vunpack.c.l.b16 %v791
        %v857 = vunpack.c.h.b16 %v791
        %v858 = vunpack.c.l.b16 %v792
        %v859 = vunpack.c.h.b16 %v792
        %v860 = vunpack.c.l.b16 %v793
        %v861 = vunpack.c.h.b16 %v793
        %v862 = vunpack.c.l.b16 %v794
        %v863 = vunpack.c.h.b16 %v794
        %v864 = vunpack.c.l.b16 %v795
        %v865 = vunpack.c.h.b16 %v795
        %v866 = vunpack.c.l.b16 %v796
        %v867 = vunpack.c.h.b16 %v796
        %v868 = vunpack.c.l.b16 %v797
        %v869 = vunpack.c.h.b16 %v797
        %v870 = vpack.c.b16 %v856, %v854
        %v871 = vpack.c.b16 %v857, %v855
        %v872 = vpack.c.b16 %v860, %v858
        %v873 = vpack.c.b16 %v861, %v859
        %v874 = vpack.c.b16 %v864, %v862
        %v875 = vpack.c.b16 %v865, %v863
        %v876 = vpack.c.b16 %v868, %v866
        %v877 = vpack.c.b16 %v869, %v867
        %886 = vmatpush.bf16.msra.mxu0 %v754
        %887 = vmatpush.bf16.msra.mxu0 %v750
        %888 = vmatpush.bf16.msra.mxu0 %v746
        %889 = vmatpush.bf16.msra.mxu0 %v742
        %890 = vmatpush.bf16.msra.mxu0 %v738
        %891 = vmatpush.bf16.msra.mxu0 %v734
        %892 = vmatpush.bf16.msra.mxu0 %v730
        %893 = vmatpush.bf16.msra.mxu0 %v726
        %894 = vmatmul.bf16.gmra.mxu0 %v870
        %v895 = vpop.f32.mrf.mxu0
        %v896 = vadd.f32 %v809, %v895
        %v897 = vpop.f32.mrf.mxu0
        %v898 = vadd.f32 %v814, %v897
        %899 = vmatmul.bf16.gmra.mxu0 %v872
        %v900 = vpop.f32.mrf.mxu0
        %v901 = vadd.f32 %v819, %v900
        %v902 = vpop.f32.mrf.mxu0
        %v903 = vadd.f32 %v824, %v902
        %904 = vmatmul.bf16.gmra.mxu0 %v874
        %v905 = vpop.f32.mrf.mxu0
        %v906 = vadd.f32 %v829, %v905
        %v907 = vpop.f32.mrf.mxu0
        %v908 = vadd.f32 %v834, %v907
        %909 = vmatmul.bf16.gmra.mxu0 %v876
        %v910 = vpop.f32.mrf.mxu0
        %v911 = vadd.f32 %v839, %v910
        %v912 = vpop.f32.mrf.mxu0
        %v913 = vadd.f32 %v844, %v912
        %914 = vdwg.mxu0
        %915 = vmatpush.bf16.msra.mxu0 %v786
        %916 = vmatpush.bf16.msra.mxu0 %v782
        %917 = vmatpush.bf16.msra.mxu0 %v778
        %918 = vmatpush.bf16.msra.mxu0 %v774
        %919 = vmatpush.bf16.msra.mxu0 %v770
        %920 = vmatpush.bf16.msra.mxu0 %v766
        %921 = vmatpush.bf16.msra.mxu0 %v762
        %922 = vmatpush.bf16.msra.mxu0 %v758
        %923 = vmatmul.bf16.gmra.mxu0 %v871
        %v924 = vpop.f32.mrf.mxu0
        %v925 = vadd.f32 %v896, %v924
        %v926 = vpop.f32.mrf.mxu0
        %v927 = vadd.f32 %v898, %v926
        %928 = vmatmul.bf16.gmra.mxu0 %v873
        %v929 = vpop.f32.mrf.mxu0
        %v930 = vadd.f32 %v901, %v929
        %v931 = vpop.f32.mrf.mxu0
        %v932 = vadd.f32 %v903, %v931
        %933 = vmatmul.bf16.gmra.mxu0 %v875
        %v934 = vpop.f32.mrf.mxu0
        %v935 = vadd.f32 %v906, %v934
        %v936 = vpop.f32.mrf.mxu0
        %v937 = vadd.f32 %v908, %v936
        %938 = vmatmul.bf16.gmra.mxu0 %v877
        %v939 = vpop.f32.mrf.mxu0
        %v940 = vadd.f32 %v911, %v939
        %v941 = vpop.f32.mrf.mxu0
        %v942 = vadd.f32 %v913, %v941
        %943 = vdwg.mxu0
        %944 = vmatpush.bf16.msra.mxu0 %v755
        %945 = vmatpush.bf16.msra.mxu0 %v751
        %946 = vmatpush.bf16.msra.mxu0 %v747
        %947 = vmatpush.bf16.msra.mxu0 %v743
        %948 = vmatpush.bf16.msra.mxu0 %v739
        %949 = vmatpush.bf16.msra.mxu0 %v735
        %950 = vmatpush.bf16.msra.mxu0 %v731
        %951 = vmatpush.bf16.msra.mxu0 %v727
        %952 = vmatmul.bf16.gmra.mxu0 %v870
        %v953 = vpop.f32.mrf.mxu0
        %v954 = vadd.f32 %v809, %v953
        %v955 = vpop.f32.mrf.mxu0
        %v956 = vadd.f32 %v814, %v955
        %957 = vmatmul.bf16.gmra.mxu0 %v872
        %v958 = vpop.f32.mrf.mxu0
        %v959 = vadd.f32 %v819, %v958
        %v960 = vpop.f32.mrf.mxu0
        %v961 = vadd.f32 %v824, %v960
        %962 = vmatmul.bf16.gmra.mxu0 %v874
        %v963 = vpop.f32.mrf.mxu0
        %v964 = vadd.f32 %v829, %v963
        %v965 = vpop.f32.mrf.mxu0
        %v966 = vadd.f32 %v834, %v965
        %967 = vmatmul.bf16.gmra.mxu0 %v876
        %v968 = vpop.f32.mrf.mxu0
        %v969 = vadd.f32 %v839, %v968
        %v970 = vpop.f32.mrf.mxu0
        %v971 = vadd.f32 %v844, %v970
        %972 = vdwg.mxu0
        %973 = vmatpush.bf16.msra.mxu0 %v787
        %974 = vmatpush.bf16.msra.mxu0 %v783
        %975 = vmatpush.bf16.msra.mxu0 %v779
        %976 = vmatpush.bf16.msra.mxu0 %v775
        %977 = vmatpush.bf16.msra.mxu0 %v771
        %978 = vmatpush.bf16.msra.mxu0 %v767
        %979 = vmatpush.bf16.msra.mxu0 %v763
        %980 = vmatpush.bf16.msra.mxu0 %v759
        %981 = vmatmul.bf16.gmra.mxu0 %v871
        %v982 = vpop.f32.mrf.mxu0
        %v983 = vadd.f32 %v954, %v982
        %v984 = vpop.f32.mrf.mxu0
        %v985 = vadd.f32 %v956, %v984
        %986 = vmatmul.bf16.gmra.mxu0 %v873
        %v987 = vpop.f32.mrf.mxu0
        %v988 = vadd.f32 %v959, %v987
        %v989 = vpop.f32.mrf.mxu0
        %v990 = vadd.f32 %v961, %v989
        %991 = vmatmul.bf16.gmra.mxu0 %v875
        %v992 = vpop.f32.mrf.mxu0
        %v993 = vadd.f32 %v964, %v992
        %v994 = vpop.f32.mrf.mxu0
        %v995 = vadd.f32 %v966, %v994
        %996 = vmatmul.bf16.gmra.mxu0 %v877
        %v997 = vpop.f32.mrf.mxu0
        %v998 = vadd.f32 %v969, %v997
        %v999 = vpop.f32.mrf.mxu0
        %v1000 = vadd.f32 %v971, %v999
        %1001 = vdwg.mxu0
        %1002 = vmatpush.bf16.msra.mxu0 %v756
        %1003 = vmatpush.bf16.msra.mxu0 %v752
        %1004 = vmatpush.bf16.msra.mxu0 %v748
        %1005 = vmatpush.bf16.msra.mxu0 %v744
        %1006 = vmatpush.bf16.msra.mxu0 %v740
        %1007 = vmatpush.bf16.msra.mxu0 %v736
        %1008 = vmatpush.bf16.msra.mxu0 %v732
        %1009 = vmatpush.bf16.msra.mxu0 %v728
        %1010 = vmatmul.bf16.gmra.mxu0 %v870
        %v1011 = vpop.f32.mrf.mxu0
        %v1012 = vadd.f32 %v809, %v1011
        %v1013 = vpop.f32.mrf.mxu0
        %v1014 = vadd.f32 %v814, %v1013
        %1015 = vmatmul.bf16.gmra.mxu0 %v872
        %v1016 = vpop.f32.mrf.mxu0
        %v1017 = vadd.f32 %v819, %v1016
        %v1018 = vpop.f32.mrf.mxu0
        %v1019 = vadd.f32 %v824, %v1018
        %1020 = vmatmul.bf16.gmra.mxu0 %v874
        %v1021 = vpop.f32.mrf.mxu0
        %v1022 = vadd.f32 %v829, %v1021
        %v1023 = vpop.f32.mrf.mxu0
        %v1024 = vadd.f32 %v834, %v1023
        %1025 = vmatmul.bf16.gmra.mxu0 %v876
        %v1026 = vpop.f32.mrf.mxu0
        %v1027 = vadd.f32 %v839, %v1026
        %v1028 = vpop.f32.mrf.mxu0
        %v1029 = vadd.f32 %v844, %v1028
        %1030 = vdwg.mxu0
        %1031 = vmatpush.bf16.msra.mxu0 %v788
        %1032 = vmatpush.bf16.msra.mxu0 %v784
        %1033 = vmatpush.bf16.msra.mxu0 %v780
        %1034 = vmatpush.bf16.msra.mxu0 %v776
        %1035 = vmatpush.bf16.msra.mxu0 %v772
        %1036 = vmatpush.bf16.msra.mxu0 %v768
        %1037 = vmatpush.bf16.msra.mxu0 %v764
        %1038 = vmatpush.bf16.msra.mxu0 %v760
        %1039 = vmatmul.bf16.gmra.mxu0 %v871
        %v1040 = vpop.f32.mrf.mxu0
        %v1041 = vadd.f32 %v1012, %v1040
        %v1042 = vpop.f32.mrf.mxu0
        %v1043 = vadd.f32 %v1014, %v1042
        %1044 = vmatmul.bf16.gmra.mxu0 %v873
        %v1045 = vpop.f32.mrf.mxu0
        %v1046 = vadd.f32 %v1017, %v1045
        %v1047 = vpop.f32.mrf.mxu0
        %v1048 = vadd.f32 %v1019, %v1047
        %1049 = vmatmul.bf16.gmra.mxu0 %v875
        %v1050 = vpop.f32.mrf.mxu0
        %v1051 = vadd.f32 %v1022, %v1050
        %v1052 = vpop.f32.mrf.mxu0
        %v1053 = vadd.f32 %v1024, %v1052
        %1054 = vmatmul.bf16.gmra.mxu0 %v877
        %v1055 = vpop.f32.mrf.mxu0
        %v1056 = vadd.f32 %v1027, %v1055
        %v1057 = vpop.f32.mrf.mxu0
        %v1058 = vadd.f32 %v1029, %v1057
        %1059 = vdwg.mxu0
        %1060 = vmatpush.bf16.msra.mxu0 %v757
        %1061 = vmatpush.bf16.msra.mxu0 %v753
        %1062 = vmatpush.bf16.msra.mxu0 %v749
        %1063 = vmatpush.bf16.msra.mxu0 %v745
        %1064 = vmatpush.bf16.msra.mxu0 %v741
        %1065 = vmatpush.bf16.msra.mxu0 %v737
        %1066 = vmatpush.bf16.msra.mxu0 %v733
        %1067 = vmatpush.bf16.msra.mxu0 %v729
        %1068 = vmatmul.bf16.gmra.mxu0 %v870
        %v1069 = vpop.f32.mrf.mxu0
        %v1070 = vadd.f32 %v809, %v1069
        %v1071 = vpop.f32.mrf.mxu0
        %v1072 = vadd.f32 %v814, %v1071
        %1073 = vmatmul.bf16.gmra.mxu0 %v872
        %v1074 = vpop.f32.mrf.mxu0
        %v1075 = vadd.f32 %v819, %v1074
        %v1076 = vpop.f32.mrf.mxu0
        %v1077 = vadd.f32 %v824, %v1076
        %1078 = vmatmul.bf16.gmra.mxu0 %v874
        %v1079 = vpop.f32.mrf.mxu0
        %v1080 = vadd.f32 %v829, %v1079
        %v1081 = vpop.f32.mrf.mxu0
        %v1082 = vadd.f32 %v834, %v1081
        %1083 = vmatmul.bf16.gmra.mxu0 %v876
        %v1084 = vpop.f32.mrf.mxu0
        %v1085 = vadd.f32 %v839, %v1084
        %v1086 = vpop.f32.mrf.mxu0
        %v1087 = vadd.f32 %v844, %v1086
        %1088 = vdwg.mxu0
        %1089 = vmatpush.bf16.msra.mxu0 %v789
        %1090 = vmatpush.bf16.msra.mxu0 %v785
        %1091 = vmatpush.bf16.msra.mxu0 %v781
        %1092 = vmatpush.bf16.msra.mxu0 %v777
        %1093 = vmatpush.bf16.msra.mxu0 %v773
        %1094 = vmatpush.bf16.msra.mxu0 %v769
        %1095 = vmatpush.bf16.msra.mxu0 %v765
        %1096 = vmatpush.bf16.msra.mxu0 %v761
        %1097 = vmatmul.bf16.gmra.mxu0 %v871
        %v1098 = vpop.f32.mrf.mxu0
        %v1099 = vadd.f32 %v1070, %v1098
        %v1100 = vpop.f32.mrf.mxu0
        %v1101 = vadd.f32 %v1072, %v1100
        %1102 = vmatmul.bf16.gmra.mxu0 %v873
        %v1103 = vpop.f32.mrf.mxu0
        %v1104 = vadd.f32 %v1075, %v1103
        %v1105 = vpop.f32.mrf.mxu0
        %v1106 = vadd.f32 %v1077, %v1105
        %1107 = vmatmul.bf16.gmra.mxu0 %v875
        %v1108 = vpop.f32.mrf.mxu0
        %v1109 = vadd.f32 %v1080, %v1108
        %v1110 = vpop.f32.mrf.mxu0
        %v1111 = vadd.f32 %v1082, %v1110
        %1112 = vmatmul.bf16.gmra.mxu0 %v877
        %v1113 = vpop.f32.mrf.mxu0
        %v1114 = vadd.f32 %v1085, %v1113
        %v1115 = vpop.f32.mrf.mxu0
        %v1116 = vadd.f32 %v1087, %v1115
        %1117 = vdwg.mxu0
        %v1118 = vmax.f32 %v925, 0.0
        %v1119 = vmax.f32 %v983, 0.0
        %v1120 = vmax.f32 %v1041, 0.0
        %v1121 = vmax.f32 %v1099, 0.0
        %v1122 = vmax.f32 %v927, 0.0
        %v1123 = vmax.f32 %v985, 0.0
        %v1124 = vmax.f32 %v1043, 0.0
        %v1125 = vmax.f32 %v1101, 0.0
        %v1126 = vmax.f32 %v930, 0.0
        %v1127 = vmax.f32 %v988, 0.0
        %v1128 = vmax.f32 %v1046, 0.0
        %v1129 = vmax.f32 %v1104, 0.0
        %v1130 = vmax.f32 %v932, 0.0
        %v1131 = vmax.f32 %v990, 0.0
        %v1132 = vmax.f32 %v1048, 0.0
        %v1133 = vmax.f32 %v1106, 0.0
        %v1134 = vmax.f32 %v935, 0.0
        %v1135 = vmax.f32 %v993, 0.0
        %v1136 = vmax.f32 %v1051, 0.0
        %v1137 = vmax.f32 %v1109, 0.0
        %v1138 = vmax.f32 %v937, 0.0
        %v1139 = vmax.f32 %v995, 0.0
        %v1140 = vmax.f32 %v1053, 0.0
        %v1141 = vmax.f32 %v1111, 0.0
        %v1142 = vmax.f32 %v940, 0.0
        %v1143 = vmax.f32 %v998, 0.0
        %v1144 = vmax.f32 %v1056, 0.0
        %v1145 = vmax.f32 %v1114, 0.0
        %v1146 = vmax.f32 %v942, 0.0
        %v1147 = vmax.f32 %v1000, 0.0
        %v1148 = vmax.f32 %v1058, 0.0
        %v1149 = vmax.f32 %v1116, 0.0
        %v1150 = vld [vmem:[#allocation3] sm:$0xf]
        %v1151 = vld [vmem:[#allocation3 + $0x4] sm:$0xf]
        %v1152 = vld [vmem:[#allocation3 + $0x8] sm:$0xf]
        %v1153 = vld [vmem:[#allocation3 + $0xc] sm:$0xf]
        %v1154 = vpack.c.bf16 %v1122, %v1118
        %v1155 = vpack.c.bf16 %v1123, %v1119
        %v1156 = vpack.c.bf16 %v1124, %v1120
        %v1157 = vpack.c.bf16 %v1125, %v1121
        %v1158 = vpack.c.bf16 %v1130, %v1126
        %v1159 = vpack.c.bf16 %v1131, %v1127
        %v1160 = vpack.c.bf16 %v1132, %v1128
        %v1161 = vpack.c.bf16 %v1133, %v1129
        %v1162 = vpack.c.bf16 %v1138, %v1134
        %v1163 = vpack.c.bf16 %v1139, %v1135
        %v1164 = vpack.c.bf16 %v1140, %v1136
        %v1165 = vpack.c.bf16 %v1141, %v1137
        %v1166 = vpack.c.bf16 %v1146, %v1142
        %v1167 = vpack.c.bf16 %v1147, %v1143
        %v1168 = vpack.c.bf16 %v1148, %v1144
        %v1169 = vpack.c.bf16 %v1149, %v1145
        %v1170 = vld [vmem:[%s4] sm:$0xff]
        %v1171 = vld [vmem:[%s4 + $0x8] sm:$0xff]
        %v1172 = vld [vmem:[%s4 + $0x10] sm:$0xff]
        %v1173 = vld [vmem:[%s4 + $0x18] sm:$0xff]
        %1175 = vset.pattern.permute.xlu0 0
        %1176 = vperm.xlu0 %1175, %v1170
        %v1177 = vpop.permute.xlu0 %1176
        %1180 = vset.pattern.permute.xlu0 0
        %1181 = vperm.xlu0 %1180, %v1171
        %v1182 = vpop.permute.xlu0 %1181
        %1185 = vset.pattern.permute.xlu0 0
        %1186 = vperm.xlu0 %1185, %v1172
        %v1187 = vpop.permute.xlu0 %1186
        %1190 = vset.pattern.permute.xlu0 0
        %1191 = vperm.xlu0 %1190, %v1173
        %v1192 = vpop.permute.xlu0 %1191
        %v1198 = vunpack.c.l.b16 %v1150
        %v1199 = vunpack.c.l.b16 %v1151
        %v1200 = vunpack.c.l.b16 %v1152
        %v1201 = vunpack.c.l.b16 %v1153
        %v1202 = vpack.c.b16 %v1199, %v1198
        %v1203 = vpack.c.b16 %v1201, %v1200
        %vm1204 = vcmask 523264
        %v1206 = vsel %vm1204, %v1202, 0
        %v1209 = vsel %vm1204, %v1203, 0
        %1211 = vmatpush.bf16.msra.mxu0 0
        %1212 = vmatpush.bf16.msra.mxu0 0
        %1213 = vmatpush.bf16.msra.mxu0 0
        %1214 = vmatpush.bf16.msra.mxu0 0
        %1215 = vmatpush.bf16.msra.mxu0 %v1166
        %1216 = vmatpush.bf16.msra.mxu0 %v1162
        %1217 = vmatpush.bf16.msra.mxu0 %v1158
        %1218 = vmatpush.bf16.msra.mxu0 %v1154
        %1219 = vmatmul.bf16.gmra.mxu0 %v1206
        %v1220 = vpop.f32.mrf.mxu0
        %v1221 = vadd.f32 %v1177, %v1220
        %v1222 = vpop.f32.mrf.mxu0
        %v1223 = vadd.f32 %v1182, %v1222
        %1224 = vmatmul.bf16.gmra.mxu0 %v1209
        %v1225 = vpop.f32.mrf.mxu0
        %v1226 = vadd.f32 %v1187, %v1225
        %v1227 = vpop.f32.mrf.mxu0
        %v1228 = vadd.f32 %v1192, %v1227
        %1229 = vdwg.mxu0
        %1230 = vmatpush.bf16.msra.mxu0 0
        %1231 = vmatpush.bf16.msra.mxu0 0
        %1232 = vmatpush.bf16.msra.mxu0 0
        %1233 = vmatpush.bf16.msra.mxu0 0
        %1234 = vmatpush.bf16.msra.mxu0 %v1167
        %1235 = vmatpush.bf16.msra.mxu0 %v1163
        %1236 = vmatpush.bf16.msra.mxu0 %v1159
        %1237 = vmatpush.bf16.msra.mxu0 %v1155
        %1238 = vmatmul.bf16.gmra.mxu0 %v1206
        %v1239 = vpop.f32.mrf.mxu0
        %v1240 = vadd.f32 %v1177, %v1239
        %v1241 = vpop.f32.mrf.mxu0
        %v1242 = vadd.f32 %v1182, %v1241
        %1243 = vmatmul.bf16.gmra.mxu0 %v1209
        %v1244 = vpop.f32.mrf.mxu0
        %v1245 = vadd.f32 %v1187, %v1244
        %v1246 = vpop.f32.mrf.mxu0
        %v1247 = vadd.f32 %v1192, %v1246
        %1248 = vdwg.mxu0
        %1249 = vmatpush.bf16.msra.mxu0 0
        %1250 = vmatpush.bf16.msra.mxu0 0
        %1251 = vmatpush.bf16.msra.mxu0 0
        %1252 = vmatpush.bf16.msra.mxu0 0
        %1253 = vmatpush.bf16.msra.mxu0 %v1168
        %1254 = vmatpush.bf16.msra.mxu0 %v1164
        %1255 = vmatpush.bf16.msra.mxu0 %v1160
        %1256 = vmatpush.bf16.msra.mxu0 %v1156
        %1257 = vmatmul.bf16.gmra.mxu0 %v1206
        %v1258 = vpop.f32.mrf.mxu0
        %v1259 = vadd.f32 %v1177, %v1258
        %v1260 = vpop.f32.mrf.mxu0
        %v1261 = vadd.f32 %v1182, %v1260
        %1262 = vmatmul.bf16.gmra.mxu0 %v1209
        %v1263 = vpop.f32.mrf.mxu0
        %v1264 = vadd.f32 %v1187, %v1263
        %v1265 = vpop.f32.mrf.mxu0
        %v1266 = vadd.f32 %v1192, %v1265
        %1267 = vdwg.mxu0
        %1268 = vmatpush.bf16.msra.mxu0 0
        %1269 = vmatpush.bf16.msra.mxu0 0
        %1270 = vmatpush.bf16.msra.mxu0 0
        %1271 = vmatpush.bf16.msra.mxu0 0
        %1272 = vmatpush.bf16.msra.mxu0 %v1169
        %1273 = vmatpush.bf16.msra.mxu0 %v1165
        %1274 = vmatpush.bf16.msra.mxu0 %v1161
        %1275 = vmatpush.bf16.msra.mxu0 %v1157
        %1276 = vmatmul.bf16.gmra.mxu0 %v1206
        %v1277 = vpop.f32.mrf.mxu0
        %v1278 = vadd.f32 %v1177, %v1277
        %v1279 = vpop.f32.mrf.mxu0
        %v1280 = vadd.f32 %v1182, %v1279
        %1281 = vmatmul.bf16.gmra.mxu0 %v1209
        %v1282 = vpop.f32.mrf.mxu0
        %v1283 = vadd.f32 %v1187, %v1282
        %v1284 = vpop.f32.mrf.mxu0
        %v1285 = vadd.f32 %v1192, %v1284
        %1286 = vdwg.mxu0
        %v1287 = vmax.f32 %v1221, 0.0
        %v1288 = vmax.f32 %v1240, 0.0
        %v1289 = vmax.f32 %v1259, 0.0
        %v1290 = vmax.f32 %v1278, 0.0
        %v1291 = vmax.f32 %v1223, 0.0
        %v1292 = vmax.f32 %v1242, 0.0
        %v1293 = vmax.f32 %v1261, 0.0
        %v1294 = vmax.f32 %v1280, 0.0
        %v1295 = vmax.f32 %v1226, 0.0
        %v1296 = vmax.f32 %v1245, 0.0
        %v1297 = vmax.f32 %v1264, 0.0
        %v1298 = vmax.f32 %v1283, 0.0
        %v1299 = vmax.f32 %v1228, 0.0
        %v1300 = vmax.f32 %v1247, 0.0
        %v1301 = vmax.f32 %v1266, 0.0
        %v1302 = vmax.f32 %v1285, 0.0
        %v1303 = vld [vmem:[%s5] sm:$0x1]
        %v1304 = vpack.c.bf16 %v1291, %v1287
        %v1305 = vpack.c.bf16 %v1292, %v1288
        %v1306 = vpack.c.bf16 %v1293, %v1289
        %v1307 = vpack.c.bf16 %v1294, %v1290
        %v1308 = vpack.c.bf16 %v1299, %v1295
        %v1309 = vpack.c.bf16 %v1300, %v1296
        %v1310 = vpack.c.bf16 %v1301, %v1297
        %v1311 = vpack.c.bf16 %v1302, %v1298
        %s1312 = sld [smem:[#allocation2]]
        %v1313 = vstv %s1312
        %vm1314 = vcmask 261120
        %v1316 = vsel %vm1314, %v1303, 0
        %1318 = vmatpush.bf16.msra.mxu0 0
        %1319 = vmatpush.bf16.msra.mxu0 0
        %1320 = vmatpush.bf16.msra.mxu0 0
        %1321 = vmatpush.bf16.msra.mxu0 0
        %1322 = vmatpush.bf16.msra.mxu0 0
        %1323 = vmatpush.bf16.msra.mxu0 0
        %1324 = vmatpush.bf16.msra.mxu0 %v1308
        %1325 = vmatpush.bf16.msra.mxu0 %v1304
        %1326 = vmatmul.bf16.gmra.mxu0 %v1316
        %v1327 = vpop.f32.mrf.mxu0
        %v1328 = vadd.f32 %v1313, %v1327
        %v1329 = vpop.f32.mrf.mxu0
        %1330 = vdwg.mxu0
        %1331 = vmatpush.bf16.msra.mxu0 0
        %1332 = vmatpush.bf16.msra.mxu0 0
        %1333 = vmatpush.bf16.msra.mxu0 0
        %1334 = vmatpush.bf16.msra.mxu0 0
        %1335 = vmatpush.bf16.msra.mxu0 0
        %1336 = vmatpush.bf16.msra.mxu0 0
        %1337 = vmatpush.bf16.msra.mxu0 %v1309
        %1338 = vmatpush.bf16.msra.mxu0 %v1305
        %1339 = vmatmul.bf16.gmra.mxu0 %v1316
        %v1340 = vpop.f32.mrf.mxu0
        %v1341 = vadd.f32 %v1313, %v1340
        %v1342 = vpop.f32.mrf.mxu0
        %1343 = vdwg.mxu0
        %1344 = vmatpush.bf16.msra.mxu0 0
        %1345 = vmatpush.bf16.msra.mxu0 0
        %1346 = vmatpush.bf16.msra.mxu0 0
        %1347 = vmatpush.bf16.msra.mxu0 0
        %1348 = vmatpush.bf16.msra.mxu0 0
        %1349 = vmatpush.bf16.msra.mxu0 0
        %1350 = vmatpush.bf16.msra.mxu0 %v1310
        %1351 = vmatpush.bf16.msra.mxu0 %v1306
        %1352 = vmatmul.bf16.gmra.mxu0 %v1316
        %v1353 = vpop.f32.mrf.mxu0
        %v1354 = vadd.f32 %v1313, %v1353
        %v1355 = vpop.f32.mrf.mxu0
        %1356 = vdwg.mxu0
        %1357 = vmatpush.bf16.msra.mxu0 0
        %1358 = vmatpush.bf16.msra.mxu0 0
        %1359 = vmatpush.bf16.msra.mxu0 0
        %1360 = vmatpush.bf16.msra.mxu0 0
        %1361 = vmatpush.bf16.msra.mxu0 0
        %1362 = vmatpush.bf16.msra.mxu0 0
        %1363 = vmatpush.bf16.msra.mxu0 %v1311
        %1364 = vmatpush.bf16.msra.mxu0 %v1307
        %1365 = vmatmul.bf16.gmra.mxu0 %v1316
        %v1366 = vpop.f32.mrf.mxu0
        %v1367 = vadd.f32 %v1313, %v1366
        %v1368 = vpop.f32.mrf.mxu0
        %1369 = vdwg.mxu0
        %v1370 = vxor.u32 %v1328, 2147483648
        %v1371 = vxor.u32 %v1341, 2147483648
        %v1372 = vxor.u32 %v1354, 2147483648
        %v1373 = vxor.u32 %v1367, 2147483648
        %v1374 = vmul.f32 %v1370, 1.442695
        %v1375 = vpow.pop %v1374
        %v1376 = vmul.f32 %v1371, 1.442695
        %v1377 = vpow.pop %v1376
        %v1378 = vmul.f32 %v1372, 1.442695
        %v1379 = vpow.pop %v1378
        %v1380 = vmul.f32 %v1373, 1.442695
        %v1381 = vpow.pop %v1380
        %v1382 = vadd.f32 %v1375, 1.0
        %v1383 = vadd.f32 %v1377, 1.0
        %v1384 = vadd.f32 %v1379, 1.0
        %v1385 = vadd.f32 %v1381, 1.0
        %v1386 = vrcp.pop %v1382
        %v1387 = vmul.f32 %v1382, %v1386
        %v1388 = vsub.f32 1.0, %v1387
        %v1389 = vmul.f32 %v1386, %v1388
        %v1390 = vadd.f32 %v1386, %v1389
        %vm1391 = vweird.f32 %v1382
        %vm1392 = vweird.f32 %v1386
        %vm1393 = vmor %vm1391, %vm1392
        %v1394 = vsel %vm1393, %v1386, %v1390
        %v1395 = vand.u32 2147483647, %v1382
        %vm1396 = vcmp.eq.f32.partialorder %v1395, 8.507059e+37
        %v1397 = vand.u32 %v1382, 2147483648
        %v1398 = vor.u32 1.1754944e-38, %v1397
        %v1399 = vsel %vm1396, %v1398, %v1394
        %v1400 = vmul.f32 1.0, %v1399
        %v1401 = vrcp.pop %v1383
        %v1402 = vmul.f32 %v1383, %v1401
        %v1403 = vsub.f32 1.0, %v1402
        %v1404 = vmul.f32 %v1401, %v1403
        %v1405 = vadd.f32 %v1401, %v1404
        %vm1406 = vweird.f32 %v1383
        %vm1407 = vweird.f32 %v1401
        %vm1408 = vmor %vm1406, %vm1407
        %v1409 = vsel %vm1408, %v1401, %v1405
        %v1410 = vand.u32 2147483647, %v1383
        %vm1411 = vcmp.eq.f32.partialorder %v1410, 8.507059e+37
        %v1412 = vand.u32 %v1383, 2147483648
        %v1413 = vor.u32 1.1754944e-38, %v1412
        %v1414 = vsel %vm1411, %v1413, %v1409
        %v1415 = vmul.f32 1.0, %v1414
        %v1416 = vrcp.pop %v1384
        %v1417 = vmul.f32 %v1384, %v1416
        %v1418 = vsub.f32 1.0, %v1417
        %v1419 = vmul.f32 %v1416, %v1418
        %v1420 = vadd.f32 %v1416, %v1419
        %vm1421 = vweird.f32 %v1384
        %vm1422 = vweird.f32 %v1416
        %vm1423 = vmor %vm1421, %vm1422
        %v1424 = vsel %vm1423, %v1416, %v1420
        %v1425 = vand.u32 2147483647, %v1384
        %vm1426 = vcmp.eq.f32.partialorder %v1425, 8.507059e+37
        %v1427 = vand.u32 %v1384, 2147483648
        %v1428 = vor.u32 1.1754944e-38, %v1427
        %v1429 = vsel %vm1426, %v1428, %v1424
        %v1430 = vmul.f32 1.0, %v1429
        %v1431 = vrcp.pop %v1385
        %v1432 = vmul.f32 %v1385, %v1431
        %v1433 = vsub.f32 1.0, %v1432
        %v1434 = vmul.f32 %v1431, %v1433
        %v1435 = vadd.f32 %v1431, %v1434
        %vm1436 = vweird.f32 %v1385
        %vm1437 = vweird.f32 %v1431
        %vm1438 = vmor %vm1436, %vm1437
        %v1439 = vsel %vm1438, %v1431, %v1435
        %v1440 = vand.u32 2147483647, %v1385
        %vm1441 = vcmp.eq.f32.partialorder %v1440, 8.507059e+37
        %v1442 = vand.u32 %v1385, 2147483648
        %v1443 = vor.u32 1.1754944e-38, %v1442
        %v1444 = vsel %vm1441, %v1443, %v1439
        %v1445 = vmul.f32 1.0, %v1444
        %v1450 = vrot.slane %v1415, 7
        %v1451 = vrot.slane %v1430, 6
        %v1452 = vrot.slane %v1445, 5
        %vm1453 = vcmask 1040384
        %v1454 = vsel %vm1453, %v1400, %v1450
        %vm1455 = vcmask 1042434
        %v1456 = vsel %vm1455, %v1451, %v1452
        %vm1457 = vcmask 1041408
        %v1458 = vsel %vm1457, %v1454, %v1456
        %v1460 = vlaneseq
        %vm1461 = vcmp.ge.s32.totalorder %v1460, 0
        %vm1462 = vcmp.lt.s32.totalorder %v1460, 512
        %vm1463 = vmand %vm1461, %vm1462
        %1464 = vst.msk [vmem:[%s290] sm:$0xf] %vm1463, %v1458
        %s1465 = sand.u32 %s183, 1
        %s1466 = scalar_lea.sflag [#allocation5], %s1465
        %s1467 = sand.u32 %s183, 1
        %s1468 = smul.addr %s1467, 4
        %s1469 = scalar_lea.vmem [#allocation6], %s1468
        // Predicated region
        $region53: #{tpu_custom_call.1} parent=47 // pred_check
          %p1470 = pneg %p193
        $region54: #{tpu_custom_call.1} parent=47 // pred_check_branch
          %1472 = sbr.rel (%p1470) target = $region56
        $region55: #{tpu_custom_call.1} parent=47 // pred_region
          %s1473 = smul.u32 4, %s23
          %1475 = vsyncadd %s1466, 0
          %s1476 = scalar_lea.hbm %s7, %s1473
          %s1478 = sshll.u32 %s1469, 4
          %s1479 = int_to_ptr.vmem [resolvable:$true] %s1478
          %s1480 = sshll.u32 %s1476, 4
          %s1481 = int_to_ptr.hbm [resolvable:$true] %s1480
          %1483 = dma.vmem_to_hbm [thread:$0]  %s1479, 64, %s1481, %s1466
        $region56: #{tpu_custom_call.1} parent=47 // pred_fallthru
          _
      $region48: #{tpu_custom_call.1} parent=5 // pred_fallthru
        _
      %p1484 = scmp.le.s32.totalorder 2, %s18
      // Predicated region
      $region57: #{tpu_custom_call.1} parent=5 // pred_check
        %p1485 = pneg %p1484
      $region58: #{tpu_custom_call.1} parent=5 // pred_check_branch
        %1487 = sbr.rel (%p1485) target = $region60
      $region59: #{tpu_custom_call.1} parent=5 // pred_region
        %s1488 = ssub.s32 %s18, 2
        // Predicated region
        $region61: #{tpu_custom_call.1} parent=59 // pred_check
          %p1489 = pneg %p199
        $region62: #{tpu_custom_call.1} parent=59 // pred_check_branch
          %1491 = sbr.rel (%p1489) target = $region64
        $region63: #{tpu_custom_call.1} parent=59 // pred_region
          %s1492 = sand.u32 %s184, 1
          %s1493 = scalar_lea.sflag [#allocation5], %s1492
          %s1494 = sand.u32 %s184, 1
          %s1495 = smul.addr %s1494, 4
          %s1496 = scalar_lea.vmem [#allocation6], %s1495
          %1498 = dma.done %s1493, 64
        $region64: #{tpu_custom_call.1} parent=59 // pred_fallthru
          _
      $region60: #{tpu_custom_call.1} parent=5 // pred_fallthru
        _
    $region6: #{tpu_custom_call.1} parent=1 // loop_footer
      %s22 = sadd.s32 1, %s18
    $region7: #{tpu_custom_call.1} parent=1 // loop_footer_branch
      %17 = sbr.rel target = $region3
    $region8: #{tpu_custom_call.1} parent=1 // loop_exit
      _
    %1499 = vsyncpa [#allocation4], 1
    %s1500 = scalar_lea.sflag [#allocation4], 1
    %1501 = vsyncpa %s1500, 1
    %1502 = vsyncpa [#allocation5], 1
    %s1503 = scalar_lea.sflag [#allocation5], 1
    %1504 = vsyncpa %s1503, 1

</llo_original>
